<compile_context>
chip_gen: v6e
topology: v6e:2x2x1
jax: 0.10.0
libtpu: 0.0.40
codegen_flags: <defaults>
</compile_context>

<pallas_src>
import functools

import jax
import jax.numpy as jnp
from jax import lax
from jax.experimental import pallas as pl
from jax.experimental.pallas import tpu as pltpu
import numpy as np


def _round_up(n, m):
    return ((n + m - 1) // m) * m


# ----------------------------------------------------------------------------
# Pallas kernels
# ----------------------------------------------------------------------------
def _matmul_bias_kernel(x_ref, w_ref, b_ref, o_ref):
    """o = x @ w + b for one (tm, tn) output tile (K kept whole per tile).

    x/w are bf16 (MXU-friendly on every generation); accumulation and the
    bias add are f32; output dtype is whatever the caller asked for.
    """
    acc = jnp.dot(x_ref[...], w_ref[...], preferred_element_type=jnp.float32)
    o_ref[...] = (acc + b_ref[...]).astype(o_ref.dtype)


def _lstm_recurrence_kernel(gx_ref, whh_ref, out_ref, hT_ref, cT_ref):
    """Sequential LSTM recurrence over one (batch block, time block).

    Grid = (batch blocks ["parallel"], time blocks ["arbitrary"]).

    gx_ref  : (Tb, Bb, 4H) bf16  precomputed x@W_ih + bias for this block
    whh_ref : (H, 4H)      f32   transposed recurrent weight
    out_ref : (Tb, Bb, H)  bf16  per-timestep hidden outputs
    hT/cT   : (Bb, H)      f32   resident output blocks carrying the state
                                 across time blocks (returned as h_n/c_n).
    """
    t_blk = pl.program_id(1)
    Tb = gx_ref.shape[0]
    H = whh_ref.shape[0]

    @pl.when(t_blk == 0)
    def _():
        # hs=None in the PyTorch module -> zero initial state.
        hT_ref[...] = jnp.zeros_like(hT_ref)
        cT_ref[...] = jnp.zeros_like(cT_ref)

    whh = whh_ref[...]                     # hoist the weight load out of the loop

    def step(t, carry):
        h, c = carry
        # Only the hidden-to-hidden matmul remains on the serial path.
        gates = (gx_ref[t].astype(jnp.float32)
                 + jnp.dot(h, whh, preferred_element_type=jnp.float32))
        # PyTorch gate order: input, forget, cell(g), output.
        # i and f are contiguous -> one wide EUP sigmoid push.
        if_g = jax.nn.sigmoid(gates[:, 0:2 * H])
        i_g = if_g[:, 0:H]
        f_g = if_g[:, H:2 * H]
        g_g = jnp.tanh(gates[:, 2 * H:3 * H])
        o_g = jax.nn.sigmoid(gates[:, 3 * H:4 * H])
        c = f_g * c + i_g * g_g
        h = o_g * jnp.tanh(c)
        out_ref[t] = h.astype(out_ref.dtype)
        return (h, c)

    h, c = lax.fori_loop(0, Tb, step, (hT_ref[...], cT_ref[...]),
                         unroll=min(Tb, 8))

    # Final-state write once per time block (not once per timestep).
    hT_ref[...] = h
    cT_ref[...] = c


# ----------------------------------------------------------------------------
# Tiling helpers
# ----------------------------------------------------------------------------
def _pick_tile(dim, target, align):
    """Largest divisor of `dim` that is <= target and a multiple of `align`;
    falls back to the full dim (single block) for small/awkward sizes.
    TODO(synk): pad ragged large dims to the next tile multiple instead of
    falling back to one giant block."""
    if dim <= target:
        return dim
    for t in range(target, 0, -1):
        if dim % t == 0 and t % align == 0:
            return t
    return dim


def _pick_batch_block(Bp):
    """Sublane-aligned batch block; >=2 blocks when B is large enough so the
    'parallel' axis can shard the recurrence across TensorCores (v7x)."""
    if Bp <= 8:
        return Bp
    for bb in range(Bp // 2, 7, -1):
        if Bp % bb == 0 and bb % 8 == 0:
            return bb
    return Bp


def _pick_time_block(T, Bb, H, budget_bytes=8 << 20):
    """Largest divisor of T whose double-buffered bf16 gates+out blocks fit."""
    per_step = Bb * (4 * H + H) * 2          # bf16 gates block + bf16 out block
    max_tb = max(1, budget_bytes // (2 * per_step))
    if T <= max_tb:
        return T
    for tb in range(int(max_tb), 0, -1):
        if T % tb == 0:
            return tb
    return 1


# ----------------------------------------------------------------------------
# Pallas wrappers
# ----------------------------------------------------------------------------
def matmul_bias_pallas(x, w, b, *, out_dtype=jnp.float32,
                       tm_target=256, tn_target=512):
    """out = x @ w + b; bf16 MXU operands, f32 accumulate, tiled over rows/cols
    with both grid axes 'parallel' (megacore-shardable)."""
    x = x.astype(jnp.bfloat16)
    w = w.astype(jnp.bfloat16)
    b = b.astype(jnp.float32)
    M, K = x.shape
    N = w.shape[1]
    tm = _pick_tile(M, tm_target, 8)
    tn = _pick_tile(N, tn_target, 128)
    return pl.pallas_call(
        _matmul_bias_kernel,
        out_shape=jax.ShapeDtypeStruct((M, N), out_dtype),
        grid_spec=pltpu.PrefetchScalarGridSpec(
            num_scalar_prefetch=0,
            grid=(M // tm, N // tn),
            in_specs=[
                pl.BlockSpec((tm, K), lambda i, j: (i, 0)),
                pl.BlockSpec((K, tn), lambda i, j: (0, j)),
                pl.BlockSpec((1, tn), lambda i, j: (0, j)),
            ],
            out_specs=pl.BlockSpec((tm, tn), lambda i, j: (i, j)),
        ),
        compiler_params=pltpu.CompilerParams(
            dimension_semantics=("parallel", "parallel")),
    )(x, w, b)


def lstm_recurrence_pallas(gates_x, w_hh_t):
    """gates_x: (T, Bp, 4H) bf16 precomputed input contribution.
    Returns (out (T,Bp,H) bf16, h_T (Bp,H) f32, c_T (Bp,H) f32)."""
    T, Bp, G4 = gates_x.shape
    H = w_hh_t.shape[0]
    Bb = _pick_batch_block(Bp)
    Tb = _pick_time_block(T, Bb, H)
    nb, nt = Bp // Bb, T // Tb

    # Explicit scoped-VMEM limit with headroom; capped for v7x (64 MiB phys).
    blk_bytes = Tb * Bb * (G4 + H) * 2              # bf16 gates + hidden blocks
    vmem_bytes = (2 * blk_bytes + 2 * H * G4 * 4 + 4 * Bb * H * 4) + (4 << 20)
    vmem_limit = int(max(32 << 20, min(vmem_bytes, 64 << 20)))

    out, hT, cT = pl.pallas_call(
        _lstm_recurrence_kernel,
        out_shape=(
            jax.ShapeDtypeStruct((T, Bp, H), jnp.bfloat16),
            jax.ShapeDtypeStruct((Bp, H), jnp.float32),
            jax.ShapeDtypeStruct((Bp, H), jnp.float32),
        ),
        grid_spec=pltpu.PrefetchScalarGridSpec(
            num_scalar_prefetch=0,
            grid=(nb, nt),
            in_specs=[
                pl.BlockSpec((Tb, Bb, G4), lambda b, t: (t, b, 0)),
                pl.BlockSpec((H, G4), lambda b, t: (0, 0)),
            ],
            out_specs=[
                pl.BlockSpec((Tb, Bb, H), lambda b, t: (t, b, 0)),
                pl.BlockSpec((Bb, H), lambda b, t: (b, 0)),   # resident state
                pl.BlockSpec((Bb, H), lambda b, t: (b, 0)),   # resident state
            ],
        ),
        compiler_params=pltpu.CompilerParams(
            dimension_semantics=("parallel", "arbitrary"),
            vmem_limit_bytes=vmem_limit),
    )(gates_x.astype(jnp.bfloat16), w_hh_t.astype(jnp.float32))
    return out, hT, cT


@functools.partial(jax.jit, static_argnames=("num_layers", "hidden_size"))
def lstm_model_forward(sequence, params, num_layers, hidden_size):
    """Forward pass of `lstm_model` (eval semantics).

    sequence: (B, T, V) float32, batch_first (same as the PyTorch module).
    Returns: (output (B*T, V), (h_n (L, B, H), c_n (L, B, H)))
    """
    B, T, V = sequence.shape
    H = hidden_size
    Bp = _round_up(B, 8)                       # sublane-aligned batch

    # Time-major, bf16 (one-hot 0/1 is exact in bf16); pad batch with zeros.
    x = jnp.transpose(sequence, (1, 0, 2)).astype(jnp.bfloat16)   # (T, B, V)
    if Bp != B:
        x = jnp.pad(x, ((0, 0), (0, Bp - B), (0, 0)))

    h_finals, c_finals = [], []
    for l in range(num_layers):
        p = params["lstm"][l]
        I = x.shape[-1]
        # Phase 1: hoisted input matmul for ALL timesteps as one big MXU op;
        # gates_x stored in bf16 to halve the HBM round-trip.
        gx_flat = matmul_bias_pallas(x.reshape(T * Bp, I), p["w_ih_t"],
                                     p["bias"], out_dtype=jnp.bfloat16)
        gates_x = gx_flat.reshape(T, Bp, 4 * H)
        # Phase 2: sequential recurrence; batch blocks parallel, time blocked.
        x, hT, cT = lstm_recurrence_pallas(gates_x, p["w_hh_t"])
        h_finals.append(hT[:B])
        c_finals.append(cT[:B])

    # Final projection applied directly to the time-major bf16 hidden buffer;
    # only the (small) logits are reordered to PyTorch's batch-major order.
    out_flat_tm = x.reshape(T * Bp, H)
    logits_tm = matmul_bias_pallas(out_flat_tm, params["linear"]["w_t"],
                                   params["linear"]["b"],
                                   out_dtype=jnp.float32)          # (T*Bp, V)
    logits = jnp.transpose(logits_tm.reshape(T, Bp, V),
                           (1, 0, 2))[:B].reshape(-1, V)           # (B*T, V)

    h_n = jnp.stack(h_finals, axis=0)              # (L, B, H)
    c_n = jnp.stack(c_finals, axis=0)
    return logits, (h_n, c_n)


# ----------------------------------------------------------------------------
# Pure-JAX reference with MATCHED numerics (bf16 MXU operands / bf16 stored
# intermediates, f32 accumulation and f32 gate math) for the correctness check.
# ----------------------------------------------------------------------------
def reference_forward(sequence, params, num_layers, hidden_size):
    B, T, V = sequence.shape
    H = hidden_size
    x = jnp.transpose(sequence, (1, 0, 2)).astype(jnp.bfloat16)   # (T, B, V)
    h_finals, c_finals = [], []
    for l in range(num_layers):
        p = params["lstm"][l]
        w_ih = p["w_ih_t"].astype(jnp.bfloat16)
        gx = (jnp.dot(x.reshape(T * B, -1), w_ih,
                      preferred_element_type=jnp.float32) + p["bias"])
        gx = gx.astype(jnp.bfloat16).reshape(T, B, 4 * H)          # stored bf16
        h = jnp.zeros((B, H), jnp.float32)
        c = jnp.zeros((B, H), jnp.float32)
        outs = []
        for t in range(T):
            gates = gx[t].astype(jnp.float32) + h @ p["w_hh_t"]
            i_g = jax.nn.sigmoid(gates[:, 0 * H:1 * H])
            f_g = jax.nn.sigmoid(gates[:, 1 * H:2 * H])
            g_g = jnp.tanh(gates[:, 2 * H:3 * H])
            o_g = jax.nn.sigmoid(gates[:, 3 * H:4 * H])
            c = f_g * c + i_g * g_g
            h = o_g * jnp.tanh(c)
            outs.append(h)
        x = jnp.stack(outs, axis=0).astype(jnp.bfloat16)           # stored bf16
        h_finals.append(h)
        c_finals.append(c)
    out_flat = jnp.transpose(x, (1, 0, 2)).reshape(-1, H)
    logits = (jnp.dot(out_flat, params["linear"]["w_t"].astype(jnp.bfloat16),
                      preferred_element_type=jnp.float32)
              + params["linear"]["b"])
    return logits, (jnp.stack(h_finals, 0), jnp.stack(c_finals, 0))


# ----------------------------------------------------------------------------
# Deterministic parameter init (matching PyTorch init scales / shapes)
# ----------------------------------------------------------------------------
def init_params(key, vocab_size, hidden_size, num_layers):
    H, V = hidden_size, vocab_size
    k_lstm = 1.0 / np.sqrt(H)
    params = {"lstm": [], "linear": {}}
    for l in range(num_layers):
        in_sz = V if l == 0 else H
        key, k1, k2, k3, k4 = jax.random.split(key, 5)
        w_ih = jax.random.uniform(k1, (4 * H, in_sz), jnp.float32,
                                  -k_lstm, k_lstm)
        w_hh = jax.random.uniform(k2, (4 * H, H), jnp.float32,
                                  -k_lstm, k_lstm)
        b_ih = jax.random.uniform(k3, (4 * H,), jnp.float32, -k_lstm, k_lstm)
        b_hh = jax.random.uniform(k4, (4 * H,), jnp.float32, -k_lstm, k_lstm)
        params["lstm"].append({
            "w_ih_t": w_ih.T,                       # (in, 4H)
            "w_hh_t": w_hh.T,                       # (H, 4H)
            "bias": (b_ih + b_hh).reshape(1, 4 * H)
        })
    key, k1, k2 = jax.random.split(key, 3)
    k_lin = 1.0 / np.sqrt(H)
    w = jax.random.uniform(k1, (V, H), jnp.float32, -k_lin, k_lin)
    b = jax.random.uniform(k2, (V,), jnp.float32, -k_lin, k_lin)
    params["linear"]["w_t"] = w.T                   # (H, V)
    params["linear"]["b"] = b.reshape(1, V)
    return params


if __name__ == "__main__":
    # Small, forward-consistent shapes: vocab=16 chars, hidden=32, 2 layers.
    B, T, V, H, L = 2, 8, 16, 32, 2

    key = jax.random.PRNGKey(0)
    key, pkey, xkey = jax.random.split(key, 3)
    params = init_params(pkey, V, H, L)

    # one-hot encoded character sequence, batch_first (B, T, V)
    idx = jax.random.randint(xkey, (B, T), 0, V)
    sequence = jax.nn.one_hot(idx, V, dtype=jnp.float32)

    logits, (h_n, c_n) = lstm_model_forward(sequence, params,
                                            num_layers=L, hidden_size=H)
    jax.block_until_ready((logits, h_n, c_n))

    ref_logits, (ref_h, ref_c) = reference_forward(sequence, params, L, H)

    assert logits.shape == (B * T, V)
    assert h_n.shape == (L, B, H) and c_n.shape == (L, B, H)
    np.testing.assert_allclose(np.asarray(logits), np.asarray(ref_logits),
                               rtol=1e-2, atol=1e-2)
    np.testing.assert_allclose(np.asarray(h_n), np.asarray(ref_h),
                               rtol=1e-2, atol=1e-2)
    np.testing.assert_allclose(np.asarray(c_n), np.asarray(ref_c),
                               rtol=1e-2, atol=1e-2)

    print("KERNEL_OK")
</pallas_src>

<mosaic_0001>
module attributes {stable_mosaic.version = 11 : i64} {
  func.func @_matmul_bias_kernel(%arg0: i32, %arg1: i32, %arg2: memref<64x16xbf16, #tpu.memory_space<vmem>>, %arg3: memref<16x128xbf16, #tpu.memory_space<vmem>>, %arg4: memref<1x128xf32, #tpu.memory_space<vmem>>, %arg5: memref<64x128xbf16, #tpu.memory_space<vmem>>) attributes {dimension_semantics = [#tpu.dimension_semantics<parallel>, #tpu.dimension_semantics<parallel>], iteration_bounds = array<i64: 1, 1>, scalar_prefetch = 0 : i64, scratch_operands = 0 : i64, tpu.core_type = #tpu.core_type<tc>, window_params = [{transform_indices = @transform_0, window_bounds = array<i64: 64, 16>}, {transform_indices = @transform_1, window_bounds = array<i64: 16, 128>}, {transform_indices = @transform_2, window_bounds = array<i64: 1, 128>}, {transform_indices = @transform_3, window_bounds = array<i64: 64, 128>}]} {
    %c0 = arith.constant 0 : index
    %c0_0 = arith.constant 0 : index
    %0 = vector.load %arg2[%c0, %c0_0] : memref<64x16xbf16, #tpu.memory_space<vmem>>, vector<64x16xbf16>
    %c0_1 = arith.constant 0 : index
    %c0_2 = arith.constant 0 : index
    %1 = vector.load %arg3[%c0_1, %c0_2] : memref<16x128xbf16, #tpu.memory_space<vmem>>, vector<16x128xbf16>
    %cst = arith.constant dense<0.000000e+00> : vector<64x128xf32>
    %2 = tpu.matmul %0, %1, %cst {dimension_numbers = #tpu.dot_dimension_numbers<[1], [0], [0], [1], [0, 0, 1, 1], [], []>} : vector<64x16xbf16>, vector<16x128xbf16>, vector<64x128xf32> -> vector<64x128xf32>
    %c0_3 = arith.constant 0 : index
    %c0_4 = arith.constant 0 : index
    %3 = vector.load %arg4[%c0_3, %c0_4] : memref<1x128xf32, #tpu.memory_space<vmem>>, vector<1x128xf32>
    %4 = vector.broadcast %3 : vector<1x128xf32> to vector<64x128xf32>
    %5 = arith.addf %2, %4 : vector<64x128xf32>
    %6 = arith.truncf %5 : vector<64x128xf32> to vector<64x128xbf16>
    %c0_5 = arith.constant 0 : index
    %c0_6 = arith.constant 0 : index
    %7 = vector.load %arg5[%c0_5, %c0_6] : memref<64x128xbf16, #tpu.memory_space<vmem>>, vector<64x128xbf16>
    tpu.vector_store %arg5[%c0_5, %c0_6], %6 {strides = array<i32>} : memref<64x128xbf16, #tpu.memory_space<vmem>>, vector<64x128xbf16>,
    return
  }
  func.func @transform_0(%arg0: i32, %arg1: i32) -> (i32, i32) {
    %c0_i32 = arith.constant 0 : i32
    %c0_i32_0 = arith.constant 0 : i32
    return %arg0, %c0_i32 : i32, i32
  }
  func.func @transform_1(%arg0: i32, %arg1: i32) -> (i32, i32) {
    %c0_i32 = arith.constant 0 : i32
    %c0_i32_0 = arith.constant 0 : i32
    return %c0_i32, %arg1 : i32, i32
  }
  func.func @transform_2(%arg0: i32, %arg1: i32) -> (i32, i32) {
    %c0_i32 = arith.constant 0 : i32
    %c0_i32_0 = arith.constant 0 : i32
    return %c0_i32, %arg1 : i32, i32
  }
  func.func @transform_3(%arg0: i32, %arg1: i32) -> (i32, i32) {
    %c0_i32 = arith.constant 0 : i32
    return %arg0, %arg1 : i32, i32
  }
}

module attributes {stable_mosaic.version = 11 : i64} {
  func.func @_matmul_bias_kernel(%arg0: i32, %arg1: i32, %arg2: memref<64x32xbf16, #tpu.memory_space<vmem>>, %arg3: memref<32x128xbf16, #tpu.memory_space<vmem>>, %arg4: memref<1x128xf32, #tpu.memory_space<vmem>>, %arg5: memref<64x128xbf16, #tpu.memory_space<vmem>>) attributes {dimension_semantics = [#tpu.dimension_semantics<parallel>, #tpu.dimension_semantics<parallel>], iteration_bounds = array<i64: 1, 1>, scalar_prefetch = 0 : i64, scratch_operands = 0 : i64, tpu.core_type = #tpu.core_type<tc>, window_params = [{transform_indices = @transform_0, window_bounds = array<i64: 64, 32>}, {transform_indices = @transform_1, window_bounds = array<i64: 32, 128>}, {transform_indices = @transform_2, window_bounds = array<i64: 1, 128>}, {transform_indices = @transform_3, window_bounds = array<i64: 64, 128>}]} {
    %c0 = arith.constant 0 : index
    %c0_0 = arith.constant 0 : index
    %0 = vector.load %arg2[%c0, %c0_0] : memref<64x32xbf16, #tpu.memory_space<vmem>>, vector<64x32xbf16>
    %c0_1 = arith.constant 0 : index
    %c0_2 = arith.constant 0 : index
    %1 = vector.load %arg3[%c0_1, %c0_2] : memref<32x128xbf16, #tpu.memory_space<vmem>>, vector<32x128xbf16>
    %cst = arith.constant dense<0.000000e+00> : vector<64x128xf32>
    %2 = tpu.matmul %0, %1, %cst {dimension_numbers = #tpu.dot_dimension_numbers<[1], [0], [0], [1], [0, 0, 1, 1], [], []>} : vector<64x32xbf16>, vector<32x128xbf16>, vector<64x128xf32> -> vector<64x128xf32>
    %c0_3 = arith.constant 0 : index
    %c0_4 = arith.constant 0 : index
    %3 = vector.load %arg4[%c0_3, %c0_4] : memref<1x128xf32, #tpu.memory_space<vmem>>, vector<1x128xf32>
    %4 = vector.broadcast %3 : vector<1x128xf32> to vector<64x128xf32>
    %5 = arith.addf %2, %4 : vector<64x128xf32>
    %6 = arith.truncf %5 : vector<64x128xf32> to vector<64x128xbf16>
    %c0_5 = arith.constant 0 : index
    %c0_6 = arith.constant 0 : index
    %7 = vector.load %arg5[%c0_5, %c0_6] : memref<64x128xbf16, #tpu.memory_space<vmem>>, vector<64x128xbf16>
    tpu.vector_store %arg5[%c0_5, %c0_6], %6 {strides = array<i32>} : memref<64x128xbf16, #tpu.memory_space<vmem>>, vector<64x128xbf16>,
    return
  }
  func.func @transform_0(%arg0: i32, %arg1: i32) -> (i32, i32) {
    %c0_i32 = arith.constant 0 : i32
    %c0_i32_0 = arith.constant 0 : i32
    return %arg0, %c0_i32 : i32, i32
  }
  func.func @transform_1(%arg0: i32, %arg1: i32) -> (i32, i32) {
    %c0_i32 = arith.constant 0 : i32
    %c0_i32_0 = arith.constant 0 : i32
    return %c0_i32, %arg1 : i32, i32
  }
  func.func @transform_2(%arg0: i32, %arg1: i32) -> (i32, i32) {
    %c0_i32 = arith.constant 0 : i32
    %c0_i32_0 = arith.constant 0 : i32
    return %c0_i32, %arg1 : i32, i32
  }
  func.func @transform_3(%arg0: i32, %arg1: i32) -> (i32, i32) {
    %c0_i32 = arith.constant 0 : i32
    return %arg0, %arg1 : i32, i32
  }
}

module attributes {stable_mosaic.version = 11 : i64} {
  func.func @_lstm_recurrence_kernel(%arg0: i32, %arg1: i32, %arg2: memref<8x8x128xbf16, #tpu.memory_space<vmem>>, %arg3: memref<32x128xf32, #tpu.memory_space<vmem>>, %arg4: memref<8x8x32xbf16, #tpu.memory_space<vmem>>, %arg5: memref<8x32xf32, #tpu.memory_space<vmem>>, %arg6: memref<8x32xf32, #tpu.memory_space<vmem>>) attributes {dimension_semantics = [#tpu.dimension_semantics<parallel>, #tpu.dimension_semantics<arbitrary>], iteration_bounds = array<i64: 1, 1>, scalar_prefetch = 0 : i64, scratch_operands = 0 : i64, tpu.core_type = #tpu.core_type<tc>, window_params = [{transform_indices = @transform_0, window_bounds = array<i64: 8, 8, 128>}, {pipeline_mode = #tpu.pipeline_mode<synchronous>, transform_indices = @transform_1, window_bounds = array<i64: 32, 128>}, {transform_indices = @transform_2, window_bounds = array<i64: 8, 8, 32>}, {transform_indices = @transform_3, window_bounds = array<i64: 8, 32>}, {transform_indices = @transform_4, window_bounds = array<i64: 8, 32>}]} {
    %c0_i32 = arith.constant 0 : i32
    %0 = arith.cmpi eq, %arg1, %c0_i32 : i32
    %1 = arith.extui %0 : i1 to i32
    %c0_i32_0 = arith.constant 0 : i32
    %2 = arith.cmpi ne, %1, %c0_i32_0 : i32
    scf.if %2 {
      %cst_66 = arith.constant 0.000000e+00 : f32
      %264 = vector.broadcast %cst_66 : f32 to vector<8x32xf32>
      %c0_67 = arith.constant 0 : index
      %c0_68 = arith.constant 0 : index
      %265 = vector.load %arg5[%c0_67, %c0_68] : memref<8x32xf32, #tpu.memory_space<vmem>>, vector<8x32xf32>
      tpu.vector_store %arg5[%c0_67, %c0_68], %264 {strides = array<i32>} : memref<8x32xf32, #tpu.memory_space<vmem>>, vector<8x32xf32>,
      %cst_69 = arith.constant 0.000000e+00 : f32
      %266 = vector.broadcast %cst_69 : f32 to vector<8x32xf32>
      %c0_70 = arith.constant 0 : index
      %c0_71 = arith.constant 0 : index
      %267 = vector.load %arg6[%c0_70, %c0_71] : memref<8x32xf32, #tpu.memory_space<vmem>>, vector<8x32xf32>
      tpu.vector_store %arg6[%c0_70, %c0_71], %266 {strides = array<i32>} : memref<8x32xf32, #tpu.memory_space<vmem>>, vector<8x32xf32>,
    } else {
    }
    %c0 = arith.constant 0 : index
    %c0_1 = arith.constant 0 : index
    %3 = vector.load %arg3[%c0, %c0_1] : memref<32x128xf32, #tpu.memory_space<vmem>>, vector<32x128xf32>
    %c0_2 = arith.constant 0 : index
    %c0_3 = arith.constant 0 : index
    %4 = vector.load %arg5[%c0_2, %c0_3] : memref<8x32xf32, #tpu.memory_space<vmem>>, vector<8x32xf32>
    %c0_4 = arith.constant 0 : index
    %c0_5 = arith.constant 0 : index
    %5 = vector.load %arg6[%c0_4, %c0_5] : memref<8x32xf32, #tpu.memory_space<vmem>>, vector<8x32xf32>
    %c0_i32_6 = arith.constant 0 : i32
    %6 = arith.index_cast %c0_i32_6 : i32 to index
    %c0_7 = arith.constant 0 : index
    %c0_8 = arith.constant 0 : index
    %7 = vector.load %arg2[%6, %c0_7, %c0_8] : memref<8x8x128xbf16, #tpu.memory_space<vmem>>, vector<1x8x128xbf16>
    %8 = vector.shape_cast %7 : vector<1x8x128xbf16> to vector<8x128xbf16>
    %9 = arith.extf %8 : vector<8x128xbf16> to vector<8x128xf32>
    %cst = arith.constant dense<0.000000e+00> : vector<8x128xf32>
    %10 = tpu.matmul %4, %3, %cst {dimension_numbers = #tpu.dot_dimension_numbers<[1], [0], [0], [1], [0, 0, 1, 1], [], []>} : vector<8x32xf32>, vector<32x128xf32>, vector<8x128xf32> -> vector<8x128xf32>
    %11 = arith.addf %9, %10 : vector<8x128xf32>
    %12 = vector.extract_strided_slice %11 {offsets = [0, 0], sizes = [8, 64], strides = [1, 1]} : vector<8x128xf32> to vector<8x64xf32>
    %13 = arith.negf %12 : vector<8x64xf32>
    %14 = math.exp %13 : vector<8x64xf32>
    %cst_9 = arith.constant 1.000000e+00 : f32
    %15 = vector.broadcast %cst_9 : f32 to vector<8x64xf32>
    %16 = arith.addf %15, %14 : vector<8x64xf32>
    %17 = arith.divf %15, %16 : vector<8x64xf32>
    %18 = vector.extract_strided_slice %17 {offsets = [0, 0], sizes = [8, 32], strides = [1, 1]} : vector<8x64xf32> to vector<8x32xf32>
    %19 = vector.extract_strided_slice %17 {offsets = [0, 32], sizes = [8, 32], strides = [1, 1]} : vector<8x64xf32> to vector<8x32xf32>
    %20 = vector.extract_strided_slice %11 {offsets = [0, 64], sizes = [8, 32], strides = [1, 1]} : vector<8x128xf32> to vector<8x32xf32>
    %21 = math.tanh %20 : vector<8x32xf32>
    %22 = vector.extract_strided_slice %11 {offsets = [0, 96], sizes = [8, 32], strides = [1, 1]} : vector<8x128xf32> to vector<8x32xf32>
    %23 = arith.negf %22 : vector<8x32xf32>
    %24 = math.exp %23 : vector<8x32xf32>
    %cst_10 = arith.constant 1.000000e+00 : f32
    %25 = vector.broadcast %cst_10 : f32 to vector<8x32xf32>
    %26 = arith.addf %25, %24 : vector<8x32xf32>
    %27 = arith.divf %25, %26 : vector<8x32xf32>
    %28 = arith.mulf %19, %5 : vector<8x32xf32>
    %29 = arith.mulf %18, %21 : vector<8x32xf32>
    %30 = arith.addf %28, %29 : vector<8x32xf32>
    %31 = math.tanh %30 : vector<8x32xf32>
    %32 = arith.mulf %27, %31 : vector<8x32xf32>
    %33 = arith.truncf %32 : vector<8x32xf32> to vector<8x32xbf16>
    %34 = arith.index_cast %c0_i32_6 : i32 to index
    %c0_11 = arith.constant 0 : index
    %c0_12 = arith.constant 0 : index
    %35 = vector.load %arg4[%34, %c0_11, %c0_12] : memref<8x8x32xbf16, #tpu.memory_space<vmem>>, vector<1x8x32xbf16>
    %36 = vector.shape_cast %35 : vector<1x8x32xbf16> to vector<8x32xbf16>
    %37 = vector.shape_cast %33 : vector<8x32xbf16> to vector<1x8x32xbf16>
    tpu.vector_store %arg4[%34, %c0_11, %c0_12], %37 {strides = array<i32>} : memref<8x8x32xbf16, #tpu.memory_space<vmem>>, vector<1x8x32xbf16>,
    %c1_i32 = arith.constant 1 : i32
    %38 = arith.index_cast %c1_i32 : i32 to index
    %c0_13 = arith.constant 0 : index
    %c0_14 = arith.constant 0 : index
    %39 = vector.load %arg2[%38, %c0_13, %c0_14] : memref<8x8x128xbf16, #tpu.memory_space<vmem>>, vector<1x8x128xbf16>
    %40 = vector.shape_cast %39 : vector<1x8x128xbf16> to vector<8x128xbf16>
    %41 = arith.extf %40 : vector<8x128xbf16> to vector<8x128xf32>
    %cst_15 = arith.constant dense<0.000000e+00> : vector<8x128xf32>
    %42 = tpu.matmul %32, %3, %cst_15 {dimension_numbers = #tpu.dot_dimension_numbers<[1], [0], [0], [1], [0, 0, 1, 1], [], []>} : vector<8x32xf32>, vector<32x128xf32>, vector<8x128xf32> -> vector<8x128xf32>
    %43 = arith.addf %41, %42 : vector<8x128xf32>
    %44 = vector.extract_strided_slice %43 {offsets = [0, 0], sizes = [8, 64], strides = [1, 1]} : vector<8x128xf32> to vector<8x64xf32>
    %45 = arith.negf %44 : vector<8x64xf32>
    %46 = math.exp %45 : vector<8x64xf32>
    %cst_16 = arith.constant 1.000000e+00 : f32
    %47 = vector.broadcast %cst_16 : f32 to vector<8x64xf32>
    %48 = arith.addf %47, %46 : vector<8x64xf32>
    %49 = arith.divf %47, %48 : vector<8x64xf32>
    %50 = vector.extract_strided_slice %49 {offsets = [0, 0], sizes = [8, 32], strides = [1, 1]} : vector<8x64xf32> to vector<8x32xf32>
    %51 = vector.extract_strided_slice %49 {offsets = [0, 32], sizes = [8, 32], strides = [1, 1]} : vector<8x64xf32> to vector<8x32xf32>
    %52 = vector.extract_strided_slice %43 {offsets = [0, 64], sizes = [8, 32], strides = [1, 1]} : vector<8x128xf32> to vector<8x32xf32>
    %53 = math.tanh %52 : vector<8x32xf32>
    %54 = vector.extract_strided_slice %43 {offsets = [0, 96], sizes = [8, 32], strides = [1, 1]} : vector<8x128xf32> to vector<8x32xf32>
    %55 = arith.negf %54 : vector<8x32xf32>
    %56 = math.exp %55 : vector<8x32xf32>
    %cst_17 = arith.constant 1.000000e+00 : f32
    %57 = vector.broadcast %cst_17 : f32 to vector<8x32xf32>
    %58 = arith.addf %57, %56 : vector<8x32xf32>
    %59 = arith.divf %57, %58 : vector<8x32xf32>
    %60 = arith.mulf %51, %30 : vector<8x32xf32>
    %61 = arith.mulf %50, %53 : vector<8x32xf32>
    %62 = arith.addf %60, %61 : vector<8x32xf32>
    %63 = math.tanh %62 : vector<8x32xf32>
    %64 = arith.mulf %59, %63 : vector<8x32xf32>
    %65 = arith.truncf %64 : vector<8x32xf32> to vector<8x32xbf16>
    %66 = arith.index_cast %c1_i32 : i32 to index
    %c0_18 = arith.constant 0 : index
    %c0_19 = arith.constant 0 : index
    %67 = vector.load %arg4[%66, %c0_18, %c0_19] : memref<8x8x32xbf16, #tpu.memory_space<vmem>>, vector<1x8x32xbf16>
    %68 = vector.shape_cast %67 : vector<1x8x32xbf16> to vector<8x32xbf16>
    %69 = vector.shape_cast %65 : vector<8x32xbf16> to vector<1x8x32xbf16>
    tpu.vector_store %arg4[%66, %c0_18, %c0_19], %69 {strides = array<i32>} : memref<8x8x32xbf16, #tpu.memory_space<vmem>>, vector<1x8x32xbf16>,
    %c2_i32 = arith.constant 2 : i32
    %70 = arith.index_cast %c2_i32 : i32 to index
    %c0_20 = arith.constant 0 : index
    %c0_21 = arith.constant 0 : index
    %71 = vector.load %arg2[%70, %c0_20, %c0_21] : memref<8x8x128xbf16, #tpu.memory_space<vmem>>, vector<1x8x128xbf16>
    %72 = vector.shape_cast %71 : vector<1x8x128xbf16> to vector<8x128xbf16>
    %73 = arith.extf %72 : vector<8x128xbf16> to vector<8x128xf32>
    %cst_22 = arith.constant dense<0.000000e+00> : vector<8x128xf32>
    %74 = tpu.matmul %64, %3, %cst_22 {dimension_numbers = #tpu.dot_dimension_numbers<[1], [0], [0], [1], [0, 0, 1, 1], [], []>} : vector<8x32xf32>, vector<32x128xf32>, vector<8x128xf32> -> vector<8x128xf32>
    %75 = arith.addf %73, %74 : vector<8x128xf32>
    %76 = vector.extract_strided_slice %75 {offsets = [0, 0], sizes = [8, 64], strides = [1, 1]} : vector<8x128xf32> to vector<8x64xf32>
    %77 = arith.negf %76 : vector<8x64xf32>
    %78 = math.exp %77 : vector<8x64xf32>
    %cst_23 = arith.constant 1.000000e+00 : f32
    %79 = vector.broadcast %cst_23 : f32 to vector<8x64xf32>
    %80 = arith.addf %79, %78 : vector<8x64xf32>
    %81 = arith.divf %79, %80 : vector<8x64xf32>
    %82 = vector.extract_strided_slice %81 {offsets = [0, 0], sizes = [8, 32], strides = [1, 1]} : vector<8x64xf32> to vector<8x32xf32>
    %83 = vector.extract_strided_slice %81 {offsets = [0, 32], sizes = [8, 32], strides = [1, 1]} : vector<8x64xf32> to vector<8x32xf32>
    %84 = vector.extract_strided_slice %75 {offsets = [0, 64], sizes = [8, 32], strides = [1, 1]} : vector<8x128xf32> to vector<8x32xf32>
    %85 = math.tanh %84 : vector<8x32xf32>
    %86 = vector.extract_strided_slice %75 {offsets = [0, 96], sizes = [8, 32], strides = [1, 1]} : vector<8x128xf32> to vector<8x32xf32>
    %87 = arith.negf %86 : vector<8x32xf32>
    %88 = math.exp %87 : vector<8x32xf32>
    %cst_24 = arith.constant 1.000000e+00 : f32
    %89 = vector.broadcast %cst_24 : f32 to vector<8x32xf32>
    %90 = arith.addf %89, %88 : vector<8x32xf32>
    %91 = arith.divf %89, %90 : vector<8x32xf32>
    %92 = arith.mulf %83, %62 : vector<8x32xf32>
    %93 = arith.mulf %82, %85 : vector<8x32xf32>
    %94 = arith.addf %92, %93 : vector<8x32xf32>
    %95 = math.tanh %94 : vector<8x32xf32>
    %96 = arith.mulf %91, %95 : vector<8x32xf32>
    %97 = arith.truncf %96 : vector<8x32xf32> to vector<8x32xbf16>
    %98 = arith.index_cast %c2_i32 : i32 to index
    %c0_25 = arith.constant 0 : index
    %c0_26 = arith.constant 0 : index
    %99 = vector.load %arg4[%98, %c0_25, %c0_26] : memref<8x8x32xbf16, #tpu.memory_space<vmem>>, vector<1x8x32xbf16>
    %100 = vector.shape_cast %99 : vector<1x8x32xbf16> to vector<8x32xbf16>
    %101 = vector.shape_cast %97 : vector<8x32xbf16> to vector<1x8x32xbf16>
    tpu.vector_store %arg4[%98, %c0_25, %c0_26], %101 {strides = array<i32>} : memref<8x8x32xbf16, #tpu.memory_space<vmem>>, vector<1x8x32xbf16>,
    %c3_i32 = arith.constant 3 : i32
    %102 = arith.index_cast %c3_i32 : i32 to index
    %c0_27 = arith.constant 0 : index
    %c0_28 = arith.constant 0 : index
    %103 = vector.load %arg2[%102, %c0_27, %c0_28] : memref<8x8x128xbf16, #tpu.memory_space<vmem>>, vector<1x8x128xbf16>
    %104 = vector.shape_cast %103 : vector<1x8x128xbf16> to vector<8x128xbf16>
    %105 = arith.extf %104 : vector<8x128xbf16> to vector<8x128xf32>
    %cst_29 = arith.constant dense<0.000000e+00> : vector<8x128xf32>
    %106 = tpu.matmul %96, %3, %cst_29 {dimension_numbers = #tpu.dot_dimension_numbers<[1], [0], [0], [1], [0, 0, 1, 1], [], []>} : vector<8x32xf32>, vector<32x128xf32>, vector<8x128xf32> -> vector<8x128xf32>
    %107 = arith.addf %105, %106 : vector<8x128xf32>
    %108 = vector.extract_strided_slice %107 {offsets = [0, 0], sizes = [8, 64], strides = [1, 1]} : vector<8x128xf32> to vector<8x64xf32>
    %109 = arith.negf %108 : vector<8x64xf32>
    %110 = math.exp %109 : vector<8x64xf32>
    %cst_30 = arith.constant 1.000000e+00 : f32
    %111 = vector.broadcast %cst_30 : f32 to vector<8x64xf32>
    %112 = arith.addf %111, %110 : vector<8x64xf32>
    %113 = arith.divf %111, %112 : vector<8x64xf32>
    %114 = vector.extract_strided_slice %113 {offsets = [0, 0], sizes = [8, 32], strides = [1, 1]} : vector<8x64xf32> to vector<8x32xf32>
    %115 = vector.extract_strided_slice %113 {offsets = [0, 32], sizes = [8, 32], strides = [1, 1]} : vector<8x64xf32> to vector<8x32xf32>
    %116 = vector.extract_strided_slice %107 {offsets = [0, 64], sizes = [8, 32], strides = [1, 1]} : vector<8x128xf32> to vector<8x32xf32>
    %117 = math.tanh %116 : vector<8x32xf32>
    %118 = vector.extract_strided_slice %107 {offsets = [0, 96], sizes = [8, 32], strides = [1, 1]} : vector<8x128xf32> to vector<8x32xf32>
    %119 = arith.negf %118 : vector<8x32xf32>
    %120 = math.exp %119 : vector<8x32xf32>
    %cst_31 = arith.constant 1.000000e+00 : f32
    %121 = vector.broadcast %cst_31 : f32 to vector<8x32xf32>
    %122 = arith.addf %121, %120 : vector<8x32xf32>
    %123 = arith.divf %121, %122 : vector<8x32xf32>
    %124 = arith.mulf %115, %94 : vector<8x32xf32>
    %125 = arith.mulf %114, %117 : vector<8x32xf32>
    %126 = arith.addf %124, %125 : vector<8x32xf32>
    %127 = math.tanh %126 : vector<8x32xf32>
    %128 = arith.mulf %123, %127 : vector<8x32xf32>
    %129 = arith.truncf %128 : vector<8x32xf32> to vector<8x32xbf16>
    %130 = arith.index_cast %c3_i32 : i32 to index
    %c0_32 = arith.constant 0 : index
    %c0_33 = arith.constant 0 : index
    %131 = vector.load %arg4[%130, %c0_32, %c0_33] : memref<8x8x32xbf16, #tpu.memory_space<vmem>>, vector<1x8x32xbf16>
    %132 = vector.shape_cast %131 : vector<1x8x32xbf16> to vector<8x32xbf16>
    %133 = vector.shape_cast %129 : vector<8x32xbf16> to vector<1x8x32xbf16>
    tpu.vector_store %arg4[%130, %c0_32, %c0_33], %133 {strides = array<i32>} : memref<8x8x32xbf16, #tpu.memory_space<vmem>>, vector<1x8x32xbf16>,
    %c4_i32 = arith.constant 4 : i32
    %134 = arith.index_cast %c4_i32 : i32 to index
    %c0_34 = arith.constant 0 : index
    %c0_35 = arith.constant 0 : index
    %135 = vector.load %arg2[%134, %c0_34, %c0_35] : memref<8x8x128xbf16, #tpu.memory_space<vmem>>, vector<1x8x128xbf16>
    %136 = vector.shape_cast %135 : vector<1x8x128xbf16> to vector<8x128xbf16>
    %137 = arith.extf %136 : vector<8x128xbf16> to vector<8x128xf32>
    %cst_36 = arith.constant dense<0.000000e+00> : vector<8x128xf32>
    %138 = tpu.matmul %128, %3, %cst_36 {dimension_numbers = #tpu.dot_dimension_numbers<[1], [0], [0], [1], [0, 0, 1, 1], [], []>} : vector<8x32xf32>, vector<32x128xf32>, vector<8x128xf32> -> vector<8x128xf32>
    %139 = arith.addf %137, %138 : vector<8x128xf32>
    %140 = vector.extract_strided_slice %139 {offsets = [0, 0], sizes = [8, 64], strides = [1, 1]} : vector<8x128xf32> to vector<8x64xf32>
    %141 = arith.negf %140 : vector<8x64xf32>
    %142 = math.exp %141 : vector<8x64xf32>
    %cst_37 = arith.constant 1.000000e+00 : f32
    %143 = vector.broadcast %cst_37 : f32 to vector<8x64xf32>
    %144 = arith.addf %143, %142 : vector<8x64xf32>
    %145 = arith.divf %143, %144 : vector<8x64xf32>
    %146 = vector.extract_strided_slice %145 {offsets = [0, 0], sizes = [8, 32], strides = [1, 1]} : vector<8x64xf32> to vector<8x32xf32>
    %147 = vector.extract_strided_slice %145 {offsets = [0, 32], sizes = [8, 32], strides = [1, 1]} : vector<8x64xf32> to vector<8x32xf32>
    %148 = vector.extract_strided_slice %139 {offsets = [0, 64], sizes = [8, 32], strides = [1, 1]} : vector<8x128xf32> to vector<8x32xf32>
    %149 = math.tanh %148 : vector<8x32xf32>
    %150 = vector.extract_strided_slice %139 {offsets = [0, 96], sizes = [8, 32], strides = [1, 1]} : vector<8x128xf32> to vector<8x32xf32>
    %151 = arith.negf %150 : vector<8x32xf32>
    %152 = math.exp %151 : vector<8x32xf32>
    %cst_38 = arith.constant 1.000000e+00 : f32
    %153 = vector.broadcast %cst_38 : f32 to vector<8x32xf32>
    %154 = arith.addf %153, %152 : vector<8x32xf32>
    %155 = arith.divf %153, %154 : vector<8x32xf32>
    %156 = arith.mulf %147, %126 : vector<8x32xf32>
    %157 = arith.mulf %146, %149 : vector<8x32xf32>
    %158 = arith.addf %156, %157 : vector<8x32xf32>
    %159 = math.tanh %158 : vector<8x32xf32>
    %160 = arith.mulf %155, %159 : vector<8x32xf32>
    %161 = arith.truncf %160 : vector<8x32xf32> to vector<8x32xbf16>
    %162 = arith.index_cast %c4_i32 : i32 to index
    %c0_39 = arith.constant 0 : index
    %c0_40 = arith.constant 0 : index
    %163 = vector.load %arg4[%162, %c0_39, %c0_40] : memref<8x8x32xbf16, #tpu.memory_space<vmem>>, vector<1x8x32xbf16>
    %164 = vector.shape_cast %163 : vector<1x8x32xbf16> to vector<8x32xbf16>
    %165 = vector.shape_cast %161 : vector<8x32xbf16> to vector<1x8x32xbf16>
    tpu.vector_store %arg4[%162, %c0_39, %c0_40], %165 {strides = array<i32>} : memref<8x8x32xbf16, #tpu.memory_space<vmem>>, vector<1x8x32xbf16>,
    %c5_i32 = arith.constant 5 : i32
    %166 = arith.index_cast %c5_i32 : i32 to index
    %c0_41 = arith.constant 0 : index
    %c0_42 = arith.constant 0 : index
    %167 = vector.load %arg2[%166, %c0_41, %c0_42] : memref<8x8x128xbf16, #tpu.memory_space<vmem>>, vector<1x8x128xbf16>
    %168 = vector.shape_cast %167 : vector<1x8x128xbf16> to vector<8x128xbf16>
    %169 = arith.extf %168 : vector<8x128xbf16> to vector<8x128xf32>
    %cst_43 = arith.constant dense<0.000000e+00> : vector<8x128xf32>
    %170 = tpu.matmul %160, %3, %cst_43 {dimension_numbers = #tpu.dot_dimension_numbers<[1], [0], [0], [1], [0, 0, 1, 1], [], []>} : vector<8x32xf32>, vector<32x128xf32>, vector<8x128xf32> -> vector<8x128xf32>
    %171 = arith.addf %169, %170 : vector<8x128xf32>
    %172 = vector.extract_strided_slice %171 {offsets = [0, 0], sizes = [8, 64], strides = [1, 1]} : vector<8x128xf32> to vector<8x64xf32>
    %173 = arith.negf %172 : vector<8x64xf32>
    %174 = math.exp %173 : vector<8x64xf32>
    %cst_44 = arith.constant 1.000000e+00 : f32
    %175 = vector.broadcast %cst_44 : f32 to vector<8x64xf32>
    %176 = arith.addf %175, %174 : vector<8x64xf32>
    %177 = arith.divf %175, %176 : vector<8x64xf32>
    %178 = vector.extract_strided_slice %177 {offsets = [0, 0], sizes = [8, 32], strides = [1, 1]} : vector<8x64xf32> to vector<8x32xf32>
    %179 = vector.extract_strided_slice %177 {offsets = [0, 32], sizes = [8, 32], strides = [1, 1]} : vector<8x64xf32> to vector<8x32xf32>
    %180 = vector.extract_strided_slice %171 {offsets = [0, 64], sizes = [8, 32], strides = [1, 1]} : vector<8x128xf32> to vector<8x32xf32>
    %181 = math.tanh %180 : vector<8x32xf32>
    %182 = vector.extract_strided_slice %171 {offsets = [0, 96], sizes = [8, 32], strides = [1, 1]} : vector<8x128xf32> to vector<8x32xf32>
    %183 = arith.negf %182 : vector<8x32xf32>
    %184 = math.exp %183 : vector<8x32xf32>
    %cst_45 = arith.constant 1.000000e+00 : f32
    %185 = vector.broadcast %cst_45 : f32 to vector<8x32xf32>
    %186 = arith.addf %185, %184 : vector<8x32xf32>
    %187 = arith.divf %185, %186 : vector<8x32xf32>
    %188 = arith.mulf %179, %158 : vector<8x32xf32>
    %189 = arith.mulf %178, %181 : vector<8x32xf32>
    %190 = arith.addf %188, %189 : vector<8x32xf32>
    %191 = math.tanh %190 : vector<8x32xf32>
    %192 = arith.mulf %187, %191 : vector<8x32xf32>
    %193 = arith.truncf %192 : vector<8x32xf32> to vector<8x32xbf16>
    %194 = arith.index_cast %c5_i32 : i32 to index
    %c0_46 = arith.constant 0 : index
    %c0_47 = arith.constant 0 : index
    %195 = vector.load %arg4[%194, %c0_46, %c0_47] : memref<8x8x32xbf16, #tpu.memory_space<vmem>>, vector<1x8x32xbf16>
    %196 = vector.shape_cast %195 : vector<1x8x32xbf16> to vector<8x32xbf16>
    %197 = vector.shape_cast %193 : vector<8x32xbf16> to vector<1x8x32xbf16>
    tpu.vector_store %arg4[%194, %c0_46, %c0_47], %197 {strides = array<i32>} : memref<8x8x32xbf16, #tpu.memory_space<vmem>>, vector<1x8x32xbf16>,
    %c6_i32 = arith.constant 6 : i32
    %198 = arith.index_cast %c6_i32 : i32 to index
    %c0_48 = arith.constant 0 : index
    %c0_49 = arith.constant 0 : index
    %199 = vector.load %arg2[%198, %c0_48, %c0_49] : memref<8x8x128xbf16, #tpu.memory_space<vmem>>, vector<1x8x128xbf16>
    %200 = vector.shape_cast %199 : vector<1x8x128xbf16> to vector<8x128xbf16>
    %201 = arith.extf %200 : vector<8x128xbf16> to vector<8x128xf32>
    %cst_50 = arith.constant dense<0.000000e+00> : vector<8x128xf32>
    %202 = tpu.matmul %192, %3, %cst_50 {dimension_numbers = #tpu.dot_dimension_numbers<[1], [0], [0], [1], [0, 0, 1, 1], [], []>} : vector<8x32xf32>, vector<32x128xf32>, vector<8x128xf32> -> vector<8x128xf32>
    %203 = arith.addf %201, %202 : vector<8x128xf32>
    %204 = vector.extract_strided_slice %203 {offsets = [0, 0], sizes = [8, 64], strides = [1, 1]} : vector<8x128xf32> to vector<8x64xf32>
    %205 = arith.negf %204 : vector<8x64xf32>
    %206 = math.exp %205 : vector<8x64xf32>
    %cst_51 = arith.constant 1.000000e+00 : f32
    %207 = vector.broadcast %cst_51 : f32 to vector<8x64xf32>
    %208 = arith.addf %207, %206 : vector<8x64xf32>
    %209 = arith.divf %207, %208 : vector<8x64xf32>
    %210 = vector.extract_strided_slice %209 {offsets = [0, 0], sizes = [8, 32], strides = [1, 1]} : vector<8x64xf32> to vector<8x32xf32>
    %211 = vector.extract_strided_slice %209 {offsets = [0, 32], sizes = [8, 32], strides = [1, 1]} : vector<8x64xf32> to vector<8x32xf32>
    %212 = vector.extract_strided_slice %203 {offsets = [0, 64], sizes = [8, 32], strides = [1, 1]} : vector<8x128xf32> to vector<8x32xf32>
    %213 = math.tanh %212 : vector<8x32xf32>
    %214 = vector.extract_strided_slice %203 {offsets = [0, 96], sizes = [8, 32], strides = [1, 1]} : vector<8x128xf32> to vector<8x32xf32>
    %215 = arith.negf %214 : vector<8x32xf32>
    %216 = math.exp %215 : vector<8x32xf32>
    %cst_52 = arith.constant 1.000000e+00 : f32
    %217 = vector.broadcast %cst_52 : f32 to vector<8x32xf32>
    %218 = arith.addf %217, %216 : vector<8x32xf32>
    %219 = arith.divf %217, %218 : vector<8x32xf32>
    %220 = arith.mulf %211, %190 : vector<8x32xf32>
    %221 = arith.mulf %210, %213 : vector<8x32xf32>
    %222 = arith.addf %220, %221 : vector<8x32xf32>
    %223 = math.tanh %222 : vector<8x32xf32>
    %224 = arith.mulf %219, %223 : vector<8x32xf32>
    %225 = arith.truncf %224 : vector<8x32xf32> to vector<8x32xbf16>
    %226 = arith.index_cast %c6_i32 : i32 to index
    %c0_53 = arith.constant 0 : index
    %c0_54 = arith.constant 0 : index
    %227 = vector.load %arg4[%226, %c0_53, %c0_54] : memref<8x8x32xbf16, #tpu.memory_space<vmem>>, vector<1x8x32xbf16>
    %228 = vector.shape_cast %227 : vector<1x8x32xbf16> to vector<8x32xbf16>
    %229 = vector.shape_cast %225 : vector<8x32xbf16> to vector<1x8x32xbf16>
    tpu.vector_store %arg4[%226, %c0_53, %c0_54], %229 {strides = array<i32>} : memref<8x8x32xbf16, #tpu.memory_space<vmem>>, vector<1x8x32xbf16>,
    %c7_i32 = arith.constant 7 : i32
    %230 = arith.index_cast %c7_i32 : i32 to index
    %c0_55 = arith.constant 0 : index
    %c0_56 = arith.constant 0 : index
    %231 = vector.load %arg2[%230, %c0_55, %c0_56] : memref<8x8x128xbf16, #tpu.memory_space<vmem>>, vector<1x8x128xbf16>
    %232 = vector.shape_cast %231 : vector<1x8x128xbf16> to vector<8x128xbf16>
    %233 = arith.extf %232 : vector<8x128xbf16> to vector<8x128xf32>
    %cst_57 = arith.constant dense<0.000000e+00> : vector<8x128xf32>
    %234 = tpu.matmul %224, %3, %cst_57 {dimension_numbers = #tpu.dot_dimension_numbers<[1], [0], [0], [1], [0, 0, 1, 1], [], []>} : vector<8x32xf32>, vector<32x128xf32>, vector<8x128xf32> -> vector<8x128xf32>
    %235 = arith.addf %233, %234 : vector<8x128xf32>
    %236 = vector.extract_strided_slice %235 {offsets = [0, 0], sizes = [8, 64], strides = [1, 1]} : vector<8x128xf32> to vector<8x64xf32>
    %237 = arith.negf %236 : vector<8x64xf32>
    %238 = math.exp %237 : vector<8x64xf32>
    %cst_58 = arith.constant 1.000000e+00 : f32
    %239 = vector.broadcast %cst_58 : f32 to vector<8x64xf32>
    %240 = arith.addf %239, %238 : vector<8x64xf32>
    %241 = arith.divf %239, %240 : vector<8x64xf32>
    %242 = vector.extract_strided_slice %241 {offsets = [0, 0], sizes = [8, 32], strides = [1, 1]} : vector<8x64xf32> to vector<8x32xf32>
    %243 = vector.extract_strided_slice %241 {offsets = [0, 32], sizes = [8, 32], strides = [1, 1]} : vector<8x64xf32> to vector<8x32xf32>
    %244 = vector.extract_strided_slice %235 {offsets = [0, 64], sizes = [8, 32], strides = [1, 1]} : vector<8x128xf32> to vector<8x32xf32>
    %245 = math.tanh %244 : vector<8x32xf32>
    %246 = vector.extract_strided_slice %235 {offsets = [0, 96], sizes = [8, 32], strides = [1, 1]} : vector<8x128xf32> to vector<8x32xf32>
    %247 = arith.negf %246 : vector<8x32xf32>
    %248 = math.exp %247 : vector<8x32xf32>
    %cst_59 = arith.constant 1.000000e+00 : f32
    %249 = vector.broadcast %cst_59 : f32 to vector<8x32xf32>
    %250 = arith.addf %249, %248 : vector<8x32xf32>
    %251 = arith.divf %249, %250 : vector<8x32xf32>
    %252 = arith.mulf %243, %222 : vector<8x32xf32>
    %253 = arith.mulf %242, %245 : vector<8x32xf32>
    %254 = arith.addf %252, %253 : vector<8x32xf32>
    %255 = math.tanh %254 : vector<8x32xf32>
    %256 = arith.mulf %251, %255 : vector<8x32xf32>
    %257 = arith.truncf %256 : vector<8x32xf32> to vector<8x32xbf16>
    %258 = arith.index_cast %c7_i32 : i32 to index
    %c0_60 = arith.constant 0 : index
    %c0_61 = arith.constant 0 : index
    %259 = vector.load %arg4[%258, %c0_60, %c0_61] : memref<8x8x32xbf16, #tpu.memory_space<vmem>>, vector<1x8x32xbf16>
    %260 = vector.shape_cast %259 : vector<1x8x32xbf16> to vector<8x32xbf16>
    %261 = vector.shape_cast %257 : vector<8x32xbf16> to vector<1x8x32xbf16>
    tpu.vector_store %arg4[%258, %c0_60, %c0_61], %261 {strides = array<i32>} : memref<8x8x32xbf16, #tpu.memory_space<vmem>>, vector<1x8x32xbf16>,
    %c8_i32 = arith.constant 8 : i32
    %c0_62 = arith.constant 0 : index
    %c0_63 = arith.constant 0 : index
    %262 = vector.load %arg5[%c0_62, %c0_63] : memref<8x32xf32, #tpu.memory_space<vmem>>, vector<8x32xf32>
    tpu.vector_store %arg5[%c0_62, %c0_63], %256 {strides = array<i32>} : memref<8x32xf32, #tpu.memory_space<vmem>>, vector<8x32xf32>,
    %c0_64 = arith.constant 0 : index
    %c0_65 = arith.constant 0 : index
    %263 = vector.load %arg6[%c0_64, %c0_65] : memref<8x32xf32, #tpu.memory_space<vmem>>, vector<8x32xf32>
    tpu.vector_store %arg6[%c0_64, %c0_65], %254 {strides = array<i32>} : memref<8x32xf32, #tpu.memory_space<vmem>>, vector<8x32xf32>,
    return
  }
  func.func @transform_0(%arg0: i32, %arg1: i32) -> (i32, i32, i32) {
    %c0_i32 = arith.constant 0 : i32
    %c0_i32_0 = arith.constant 0 : i32
    return %arg1, %arg0, %c0_i32 : i32, i32, i32
  }
  func.func @transform_1(%arg0: i32, %arg1: i32) -> (i32, i32) {
    %c0_i32 = arith.constant 0 : i32
    %c0_i32_0 = arith.constant 0 : i32
    %c0_i32_1 = arith.constant 0 : i32
    return %c0_i32, %c0_i32_0 : i32, i32
  }
  func.func @transform_2(%arg0: i32, %arg1: i32) -> (i32, i32, i32) {
    %c0_i32 = arith.constant 0 : i32
    %c0_i32_0 = arith.constant 0 : i32
    return %arg1, %arg0, %c0_i32 : i32, i32, i32
  }
  func.func @transform_3(%arg0: i32, %arg1: i32) -> (i32, i32) {
    %c0_i32 = arith.constant 0 : i32
    %c0_i32_0 = arith.constant 0 : i32
    return %arg0, %c0_i32 : i32, i32
  }
  func.func @transform_4(%arg0: i32, %arg1: i32) -> (i32, i32) {
    %c0_i32 = arith.constant 0 : i32
    %c0_i32_0 = arith.constant 0 : i32
    return %arg0, %c0_i32 : i32, i32
  }
}

module attributes {stable_mosaic.version = 11 : i64} {
  func.func @_matmul_bias_kernel(%arg0: i32, %arg1: i32, %arg2: memref<64x32xbf16, #tpu.memory_space<vmem>>, %arg3: memref<32x16xbf16, #tpu.memory_space<vmem>>, %arg4: memref<1x16xf32, #tpu.memory_space<vmem>>, %arg5: memref<64x16xf32, #tpu.memory_space<vmem>>) attributes {dimension_semantics = [#tpu.dimension_semantics<parallel>, #tpu.dimension_semantics<parallel>], iteration_bounds = array<i64: 1, 1>, scalar_prefetch = 0 : i64, scratch_operands = 0 : i64, tpu.core_type = #tpu.core_type<tc>, window_params = [{transform_indices = @transform_0, window_bounds = array<i64: 64, 32>}, {transform_indices = @transform_1, window_bounds = array<i64: 32, 16>}, {transform_indices = @transform_2, window_bounds = array<i64: 1, 16>}, {transform_indices = @transform_3, window_bounds = array<i64: 64, 16>}]} {
    %c0 = arith.constant 0 : index
    %c0_0 = arith.constant 0 : index
    %0 = vector.load %arg2[%c0, %c0_0] : memref<64x32xbf16, #tpu.memory_space<vmem>>, vector<64x32xbf16>
    %c0_1 = arith.constant 0 : index
    %c0_2 = arith.constant 0 : index
    %1 = vector.load %arg3[%c0_1, %c0_2] : memref<32x16xbf16, #tpu.memory_space<vmem>>, vector<32x16xbf16>
    %cst = arith.constant dense<0.000000e+00> : vector<64x16xf32>
    %2 = tpu.matmul %0, %1, %cst {dimension_numbers = #tpu.dot_dimension_numbers<[1], [0], [0], [1], [0, 0, 1, 1], [], []>} : vector<64x32xbf16>, vector<32x16xbf16>, vector<64x16xf32> -> vector<64x16xf32>
    %c0_3 = arith.constant 0 : index
    %c0_4 = arith.constant 0 : index
    %3 = vector.load %arg4[%c0_3, %c0_4] : memref<1x16xf32, #tpu.memory_space<vmem>>, vector<1x16xf32>
    %4 = vector.broadcast %3 : vector<1x16xf32> to vector<64x16xf32>
    %5 = arith.addf %2, %4 : vector<64x16xf32>
    %c0_5 = arith.constant 0 : index
    %c0_6 = arith.constant 0 : index
    %6 = vector.load %arg5[%c0_5, %c0_6] : memref<64x16xf32, #tpu.memory_space<vmem>>, vector<64x16xf32>
    tpu.vector_store %arg5[%c0_5, %c0_6], %5 {strides = array<i32>} : memref<64x16xf32, #tpu.memory_space<vmem>>, vector<64x16xf32>,
    return
  }
  func.func @transform_0(%arg0: i32, %arg1: i32) -> (i32, i32) {
    %c0_i32 = arith.constant 0 : i32
    %c0_i32_0 = arith.constant 0 : i32
    return %arg0, %c0_i32 : i32, i32
  }
  func.func @transform_1(%arg0: i32, %arg1: i32) -> (i32, i32) {
    %c0_i32 = arith.constant 0 : i32
    %c0_i32_0 = arith.constant 0 : i32
    return %c0_i32, %arg1 : i32, i32
  }
  func.func @transform_2(%arg0: i32, %arg1: i32) -> (i32, i32) {
    %c0_i32 = arith.constant 0 : i32
    %c0_i32_0 = arith.constant 0 : i32
    return %c0_i32, %arg1 : i32, i32
  }
  func.func @transform_3(%arg0: i32, %arg1: i32) -> (i32, i32) {
    %c0_i32 = arith.constant 0 : i32
    return %arg0, %arg1 : i32, i32
  }
}

</mosaic_0001>

<llo_original>
// kernel: lstm_model_forward.7
$region0: #{lstm_model_forward.7}
  #allocation0 [shape = 'u32[]', space=smem, size = 0x4, offset = 0x4, fixed_abs, tag = 'smem constant byte address 0x4 - core index']
  #allocation1 [shape = 'u32[144,128]{1,0:T(1,128)}', space=vmem, size = 0x12000, scoped, tag = 'internal scratch']
  %s0 = inlined_call_operand.vmem [shape: bf16[64,32], index: 0, kind: input, shape index: {}]
  %s1 = inlined_call_operand.vmem [shape: bf16[32,128], index: 1, kind: input, shape index: {}]
  %s2 = inlined_call_operand.vmem [shape: f32[1,128], index: 2, kind: input, shape index: {}]
  %s3 = inlined_call_operand.vmem [shape: bf16[64,128], index: 3, kind: output, shape index: {}]
  %s4 = sld [smem:[#allocation0]]
  $region22: #{lstm_model_forward.7} parent=0
    _
  %s6 = ssub.s32 1, %s4
  %s7 = scalar_select 0, %s6, %s4
  // Predicated region
  $region2: #{lstm_model_forward.7} parent=0 // pred_check
    _
  $region3: #{lstm_model_forward.7} parent=0 // pred_check_branch
    %9 = sbr.rel (0) target = $region5
  $region4: #{lstm_model_forward.7} parent=0 // pred_region
    _
  $region5: #{lstm_model_forward.7} parent=0 // pred_fallthru
    _
  // Predicated region
  $region6: #{lstm_model_forward.7} parent=0 // pred_check
    _
  $region7: #{lstm_model_forward.7} parent=0 // pred_check_branch
    %11 = sbr.rel (0) target = $region9
  $region8: #{lstm_model_forward.7} parent=0 // pred_region
    _
  $region9: #{lstm_model_forward.7} parent=0 // pred_fallthru
    _
  // Predicated region
  $region10: #{lstm_model_forward.7} parent=0 // pred_check
    _
  $region11: #{lstm_model_forward.7} parent=0 // pred_check_branch
    %13 = sbr.rel (0) target = $region13
  $region12: #{lstm_model_forward.7} parent=0 // pred_region
    _
  $region13: #{lstm_model_forward.7} parent=0 // pred_fallthru
    _
  %v15 = vld [vmem:[%s0] sm:$0xf]
  %v16 = vld [vmem:[%s0 + $0x4] sm:$0xf]
  %v17 = vld [vmem:[%s0 + $0x8] sm:$0xf]
  %v18 = vld [vmem:[%s0 + $0xc] sm:$0xf]
  %v19 = vld [vmem:[%s0 + $0x10] sm:$0xf]
  %v20 = vld [vmem:[%s0 + $0x14] sm:$0xf]
  %v21 = vld [vmem:[%s0 + $0x18] sm:$0xf]
  %v22 = vld [vmem:[%s0 + $0x1c] sm:$0xf]
  %v23 = vld [vmem:[%s1] sm:$0xf]
  %v24 = vld [vmem:[%s1 + $0x4] sm:$0xf]
  %v25 = vld [vmem:[%s1 + $0x8] sm:$0xf]
  %v26 = vld [vmem:[%s1 + $0xc] sm:$0xf]
  %v27 = vld [vmem:[%s2] sm:$0x1]
  %v29 = vlaneseq
  %v30 = vshrl.u32 %v29, 7
  %v31 = vsub.s32 0, %v30
  %v32 = vrot.slane %v27, %v31
  %v42 = vunpack.c.l.b16 %v15
  %v43 = vunpack.c.l.b16 %v16
  %v44 = vunpack.c.l.b16 %v17
  %v45 = vunpack.c.l.b16 %v18
  %v46 = vunpack.c.l.b16 %v19
  %v47 = vunpack.c.l.b16 %v20
  %v48 = vunpack.c.l.b16 %v21
  %v49 = vunpack.c.l.b16 %v22
  %v50 = vpack.c.b16 %v43, %v42
  %v51 = vpack.c.b16 %v45, %v44
  %v52 = vpack.c.b16 %v47, %v46
  %v53 = vpack.c.b16 %v49, %v48
  %v58 = vunpack.c.l.b16 %v23
  %v59 = vunpack.c.l.b16 %v24
  %v60 = vunpack.c.l.b16 %v25
  %v61 = vunpack.c.l.b16 %v26
  %v62 = vpack.c.b16 %v59, %v58
  %v63 = vpack.c.b16 %v61, %v60
  %vm66 = vcmask 261120
  %v68 = vsel %vm66, %v50, 0
  %v71 = vsel %vm66, %v51, 0
  %v74 = vsel %vm66, %v52, 0
  %v77 = vsel %vm66, %v53, 0
  %79 = vmatprep.subr.bf16.mxu0 0
  %80 = vmatpush1.bf16.msra.mxu0 0
  %81 = vmatprep.subr.bf16.mxu0 0
  %82 = vmatpush1.bf16.msra.mxu0 0
  %83 = vmatprep.subr.bf16.mxu0 0
  %84 = vmatpush1.bf16.msra.mxu0 0
  %85 = vmatprep.subr.bf16.mxu0 0
  %86 = vmatpush1.bf16.msra.mxu0 0
  %87 = vmatprep.subr.bf16.mxu0 0
  %88 = vmatpush1.bf16.msra.mxu0 0
  %89 = vmatprep.subr.bf16.mxu0 0
  %90 = vmatpush1.bf16.msra.mxu0 0
  %91 = vmatprep.subr.bf16.mxu0 0
  %92 = vmatpush1.bf16.msra.mxu0 %v63
  %93 = vmatprep.subr.bf16.mxu0 0
  %94 = vmatpush1.bf16.msra.mxu0 %v62
  %95 = vmatprep.subr.bf16.mxu0 0
  %96 = vmatpush2.bf16.msra.mxu0 0
  %97 = vmatprep.subr.bf16.mxu0 0
  %98 = vmatpush2.bf16.msra.mxu0 0
  %99 = vmatprep.subr.bf16.mxu0 0
  %100 = vmatpush2.bf16.msra.mxu0 0
  %101 = vmatprep.subr.bf16.mxu0 0
  %102 = vmatpush2.bf16.msra.mxu0 0
  %103 = vmatprep.subr.bf16.mxu0 0
  %104 = vmatpush2.bf16.msra.mxu0 0
  %105 = vmatprep.subr.bf16.mxu0 0
  %106 = vmatpush2.bf16.msra.mxu0 0
  %107 = vmatprep.subr.bf16.mxu0 0
  %108 = vmatpush2.bf16.msra.mxu0 0
  %109 = vmatprep.subr.bf16.mxu0 0
  %110 = vmatpush2.bf16.msra.mxu0 0
  %111 = vmatprep.mubr.bf16.mxu0 0
  %112 = vmatmul.mubr.bf16.gmra.mxu0 %v68
  %v113 = vpop.f32.mrf.mxu0
  %v114 = vadd.f32 %v32, %v113
  %v115 = vpop.f32.mrf.mxu0
  %v116 = vpop.f32.mrf.mxu0
  %v117 = vadd.f32 %v32, %v116
  %v118 = vpop.f32.mrf.mxu0
  %119 = vmatprep.mubr.bf16.mxu0 0
  %120 = vmatmul.mubr.bf16.gmra.mxu0 %v71
  %v121 = vpop.f32.mrf.mxu0
  %v122 = vadd.f32 %v32, %v121
  %v123 = vpop.f32.mrf.mxu0
  %v124 = vpop.f32.mrf.mxu0
  %v125 = vadd.f32 %v32, %v124
  %v126 = vpop.f32.mrf.mxu0
  %127 = vmatprep.mubr.bf16.mxu0 0
  %128 = vmatmul.mubr.bf16.gmra.mxu0 %v74
  %v129 = vpop.f32.mrf.mxu0
  %v130 = vadd.f32 %v32, %v129
  %v131 = vpop.f32.mrf.mxu0
  %v132 = vpop.f32.mrf.mxu0
  %v133 = vadd.f32 %v32, %v132
  %v134 = vpop.f32.mrf.mxu0
  %135 = vmatprep.mubr.bf16.mxu0 0
  %136 = vmatmul.mubr.bf16.gmra.mxu0 %v77
  %v137 = vpop.f32.mrf.mxu0
  %v138 = vadd.f32 %v32, %v137
  %v139 = vpop.f32.mrf.mxu0
  %v140 = vpop.f32.mrf.mxu0
  %v141 = vadd.f32 %v32, %v140
  %v142 = vpop.f32.mrf.mxu0
  %143 = vdwg.mxu0
  %v144 = vpack.c.bf16 %v117, %v114
  %v145 = vpack.c.bf16 %v125, %v122
  %v146 = vpack.c.bf16 %v133, %v130
  %v147 = vpack.c.bf16 %v141, %v138
  %v152 = vunpack.c.l.b16 %v144
  %v153 = vunpack.c.h.b16 %v144
  %v154 = vunpack.c.l.b16 %v145
  %v155 = vunpack.c.h.b16 %v145
  %v156 = vunpack.c.l.b16 %v146
  %v157 = vunpack.c.h.b16 %v146
  %v158 = vunpack.c.l.b16 %v147
  %v159 = vunpack.c.h.b16 %v147
  %v160 = vpack.c.b16 %v152, %v152
  %v161 = vpack.c.b16 %v153, %v153
  %v162 = vpack.c.b16 %v154, %v154
  %v163 = vpack.c.b16 %v155, %v155
  %v164 = vpack.c.b16 %v156, %v156
  %v165 = vpack.c.b16 %v157, %v157
  %v166 = vpack.c.b16 %v158, %v158
  %v167 = vpack.c.b16 %v159, %v159
  %176 = vst [vmem:[%s3] sm:$0xf] %v160
  %177 = vst [vmem:[%s3 + $0x4] sm:$0xf] %v161
  %178 = vst [vmem:[%s3 + $0x8] sm:$0xf] %v162
  %179 = vst [vmem:[%s3 + $0xc] sm:$0xf] %v163
  %180 = vst [vmem:[%s3 + $0x10] sm:$0xf] %v164
  %181 = vst [vmem:[%s3 + $0x14] sm:$0xf] %v165
  %182 = vst [vmem:[%s3 + $0x18] sm:$0xf] %v166
  %183 = vst [vmem:[%s3 + $0x1c] sm:$0xf] %v167
  // Predicated region
  $region14: #{lstm_model_forward.7} parent=0 // pred_check
    _
  $region15: #{lstm_model_forward.7} parent=0 // pred_check_branch
    %185 = sbr.rel (0) target = $region17
  $region16: #{lstm_model_forward.7} parent=0 // pred_region
    _
  $region17: #{lstm_model_forward.7} parent=0 // pred_fallthru
    _
  // Predicated region
  $region18: #{lstm_model_forward.7} parent=0 // pred_check
    _
  $region19: #{lstm_model_forward.7} parent=0 // pred_check_branch
    %187 = sbr.rel (0) target = $region21
  $region20: #{lstm_model_forward.7} parent=0 // pred_region
    _
  $region21: #{lstm_model_forward.7} parent=0 // pred_fallthru
    _

// kernel: lstm_model_forward.5
$region0: #{lstm_model_forward.5}
  #allocation0 [shape = 'u32[]', space=smem, size = 0x4, offset = 0x4, fixed_abs, tag = 'smem constant byte address 0x4 - core index']
  #allocation1 [shape = 'u32[144,128]{1,0:T(1,128)}', space=vmem, size = 0x12000, scoped, tag = 'internal scratch']
  %s0 = inlined_call_operand.vmem [shape: bf16[64,16], index: 0, kind: input, shape index: {}]
  %s1 = inlined_call_operand.vmem [shape: bf16[16,128], index: 1, kind: input, shape index: {}]
  %s2 = inlined_call_operand.vmem [shape: f32[1,128], index: 2, kind: input, shape index: {}]
  %s3 = inlined_call_operand.vmem [shape: bf16[64,128], index: 3, kind: output, shape index: {}]
  %s4 = sld [smem:[#allocation0]]
  $region22: #{lstm_model_forward.5} parent=0
    _
  %s6 = ssub.s32 1, %s4
  %s7 = scalar_select 0, %s6, %s4
  // Predicated region
  $region2: #{lstm_model_forward.5} parent=0 // pred_check
    _
  $region3: #{lstm_model_forward.5} parent=0 // pred_check_branch
    %9 = sbr.rel (0) target = $region5
  $region4: #{lstm_model_forward.5} parent=0 // pred_region
    _
  $region5: #{lstm_model_forward.5} parent=0 // pred_fallthru
    _
  // Predicated region
  $region6: #{lstm_model_forward.5} parent=0 // pred_check
    _
  $region7: #{lstm_model_forward.5} parent=0 // pred_check_branch
    %11 = sbr.rel (0) target = $region9
  $region8: #{lstm_model_forward.5} parent=0 // pred_region
    _
  $region9: #{lstm_model_forward.5} parent=0 // pred_fallthru
    _
  // Predicated region
  $region10: #{lstm_model_forward.5} parent=0 // pred_check
    _
  $region11: #{lstm_model_forward.5} parent=0 // pred_check_branch
    %13 = sbr.rel (0) target = $region13
  $region12: #{lstm_model_forward.5} parent=0 // pred_region
    _
  $region13: #{lstm_model_forward.5} parent=0 // pred_fallthru
    _
  %v15 = vld [vmem:[%s0] sm:$0xf]
  %v16 = vld [vmem:[%s0 + $0x4] sm:$0xf]
  %v17 = vld [vmem:[%s0 + $0x8] sm:$0xf]
  %v18 = vld [vmem:[%s0 + $0xc] sm:$0xf]
  %v19 = vld [vmem:[%s0 + $0x10] sm:$0xf]
  %v20 = vld [vmem:[%s0 + $0x14] sm:$0xf]
  %v21 = vld [vmem:[%s0 + $0x18] sm:$0xf]
  %v22 = vld [vmem:[%s0 + $0x1c] sm:$0xf]
  %v23 = vld [vmem:[%s1] sm:$0xf]
  %v24 = vld [vmem:[%s1 + $0x4] sm:$0xf]
  %v25 = vld [vmem:[%s2] sm:$0x1]
  %v27 = vlaneseq
  %v28 = vshrl.u32 %v27, 7
  %v29 = vsub.s32 0, %v28
  %v30 = vrot.slane %v25, %v29
  %v40 = vunpack.c.l.b16 %v15
  %v41 = vunpack.c.l.b16 %v16
  %v42 = vunpack.c.l.b16 %v17
  %v43 = vunpack.c.l.b16 %v18
  %v44 = vunpack.c.l.b16 %v19
  %v45 = vunpack.c.l.b16 %v20
  %v46 = vunpack.c.l.b16 %v21
  %v47 = vunpack.c.l.b16 %v22
  %v48 = vpack.c.b16 %v41, %v40
  %v49 = vpack.c.b16 %v43, %v42
  %v50 = vpack.c.b16 %v45, %v44
  %v51 = vpack.c.b16 %v47, %v46
  %v54 = vunpack.c.l.b16 %v23
  %v55 = vunpack.c.l.b16 %v24
  %v56 = vpack.c.b16 %v55, %v54
  %vm58 = vcmask 130048
  %v60 = vsel %vm58, %v48, 0
  %v63 = vsel %vm58, %v49, 0
  %v66 = vsel %vm58, %v50, 0
  %v69 = vsel %vm58, %v51, 0
  %71 = vmatprep.subr.bf16.mxu0 0
  %72 = vmatpush1.bf16.msra.mxu0 0
  %73 = vmatprep.subr.bf16.mxu0 0
  %74 = vmatpush1.bf16.msra.mxu0 0
  %75 = vmatprep.subr.bf16.mxu0 0
  %76 = vmatpush1.bf16.msra.mxu0 0
  %77 = vmatprep.subr.bf16.mxu0 0
  %78 = vmatpush1.bf16.msra.mxu0 0
  %79 = vmatprep.subr.bf16.mxu0 0
  %80 = vmatpush1.bf16.msra.mxu0 0
  %81 = vmatprep.subr.bf16.mxu0 0
  %82 = vmatpush1.bf16.msra.mxu0 0
  %83 = vmatprep.subr.bf16.mxu0 0
  %84 = vmatpush1.bf16.msra.mxu0 0
  %85 = vmatprep.subr.bf16.mxu0 0
  %86 = vmatpush1.bf16.msra.mxu0 %v56
  %87 = vmatprep.subr.bf16.mxu0 0
  %88 = vmatpush2.bf16.msra.mxu0 0
  %89 = vmatprep.subr.bf16.mxu0 0
  %90 = vmatpush2.bf16.msra.mxu0 0
  %91 = vmatprep.subr.bf16.mxu0 0
  %92 = vmatpush2.bf16.msra.mxu0 0
  %93 = vmatprep.subr.bf16.mxu0 0
  %94 = vmatpush2.bf16.msra.mxu0 0
  %95 = vmatprep.subr.bf16.mxu0 0
  %96 = vmatpush2.bf16.msra.mxu0 0
  %97 = vmatprep.subr.bf16.mxu0 0
  %98 = vmatpush2.bf16.msra.mxu0 0
  %99 = vmatprep.subr.bf16.mxu0 0
  %100 = vmatpush2.bf16.msra.mxu0 0
  %101 = vmatprep.subr.bf16.mxu0 0
  %102 = vmatpush2.bf16.msra.mxu0 0
  %103 = vmatprep.mubr.bf16.mxu0 0
  %104 = vmatmul.mubr.bf16.gmra.mxu0 %v60
  %v105 = vpop.f32.mrf.mxu0
  %v106 = vadd.f32 %v30, %v105
  %v107 = vpop.f32.mrf.mxu0
  %v108 = vpop.f32.mrf.mxu0
  %v109 = vadd.f32 %v30, %v108
  %v110 = vpop.f32.mrf.mxu0
  %111 = vmatprep.mubr.bf16.mxu0 0
  %112 = vmatmul.mubr.bf16.gmra.mxu0 %v63
  %v113 = vpop.f32.mrf.mxu0
  %v114 = vadd.f32 %v30, %v113
  %v115 = vpop.f32.mrf.mxu0
  %v116 = vpop.f32.mrf.mxu0
  %v117 = vadd.f32 %v30, %v116
  %v118 = vpop.f32.mrf.mxu0
  %119 = vmatprep.mubr.bf16.mxu0 0
  %120 = vmatmul.mubr.bf16.gmra.mxu0 %v66
  %v121 = vpop.f32.mrf.mxu0
  %v122 = vadd.f32 %v30, %v121
  %v123 = vpop.f32.mrf.mxu0
  %v124 = vpop.f32.mrf.mxu0
  %v125 = vadd.f32 %v30, %v124
  %v126 = vpop.f32.mrf.mxu0
  %127 = vmatprep.mubr.bf16.mxu0 0
  %128 = vmatmul.mubr.bf16.gmra.mxu0 %v69
  %v129 = vpop.f32.mrf.mxu0
  %v130 = vadd.f32 %v30, %v129
  %v131 = vpop.f32.mrf.mxu0
  %v132 = vpop.f32.mrf.mxu0
  %v133 = vadd.f32 %v30, %v132
  %v134 = vpop.f32.mrf.mxu0
  %135 = vdwg.mxu0
  %v136 = vpack.c.bf16 %v109, %v106
  %v137 = vpack.c.bf16 %v117, %v114
  %v138 = vpack.c.bf16 %v125, %v122
  %v139 = vpack.c.bf16 %v133, %v130
  %v144 = vunpack.c.l.b16 %v136
  %v145 = vunpack.c.h.b16 %v136
  %v146 = vunpack.c.l.b16 %v137
  %v147 = vunpack.c.h.b16 %v137
  %v148 = vunpack.c.l.b16 %v138
  %v149 = vunpack.c.h.b16 %v138
  %v150 = vunpack.c.l.b16 %v139
  %v151 = vunpack.c.h.b16 %v139
  %v152 = vpack.c.b16 %v144, %v144
  %v153 = vpack.c.b16 %v145, %v145
  %v154 = vpack.c.b16 %v146, %v146
  %v155 = vpack.c.b16 %v147, %v147
  %v156 = vpack.c.b16 %v148, %v148
  %v157 = vpack.c.b16 %v149, %v149
  %v158 = vpack.c.b16 %v150, %v150
  %v159 = vpack.c.b16 %v151, %v151
  %168 = vst [vmem:[%s3] sm:$0xf] %v152
  %169 = vst [vmem:[%s3 + $0x4] sm:$0xf] %v153
  %170 = vst [vmem:[%s3 + $0x8] sm:$0xf] %v154
  %171 = vst [vmem:[%s3 + $0xc] sm:$0xf] %v155
  %172 = vst [vmem:[%s3 + $0x10] sm:$0xf] %v156
  %173 = vst [vmem:[%s3 + $0x14] sm:$0xf] %v157
  %174 = vst [vmem:[%s3 + $0x18] sm:$0xf] %v158
  %175 = vst [vmem:[%s3 + $0x1c] sm:$0xf] %v159
  // Predicated region
  $region14: #{lstm_model_forward.5} parent=0 // pred_check
    _
  $region15: #{lstm_model_forward.5} parent=0 // pred_check_branch
    %177 = sbr.rel (0) target = $region17
  $region16: #{lstm_model_forward.5} parent=0 // pred_region
    _
  $region17: #{lstm_model_forward.5} parent=0 // pred_fallthru
    _
  // Predicated region
  $region18: #{lstm_model_forward.5} parent=0 // pred_check
    _
  $region19: #{lstm_model_forward.5} parent=0 // pred_check_branch
    %179 = sbr.rel (0) target = $region21
  $region20: #{lstm_model_forward.5} parent=0 // pred_region
    _
  $region21: #{lstm_model_forward.5} parent=0 // pred_fallthru
    _

// kernel: lstm_model_forward.9
$region0: #{lstm_model_forward.9}
  #allocation0 [shape = 'u32[]', space=smem, size = 0x4, offset = 0x4, fixed_abs, tag = 'smem constant byte address 0x4 - core index']
  #allocation1 [shape = 'u32[144,128]{1,0:T(1,128)}', space=vmem, size = 0x12000, scoped, tag = 'internal scratch']
  %s0 = inlined_call_operand.vmem [shape: bf16[64,32], index: 0, kind: input, shape index: {}]
  %s1 = inlined_call_operand.vmem [shape: bf16[32,16], index: 1, kind: input, shape index: {}]
  %s2 = inlined_call_operand.vmem [shape: f32[1,16], index: 2, kind: input, shape index: {}]
  %s3 = inlined_call_operand.vmem [shape: f32[64,16], index: 3, kind: output, shape index: {}]
  %s4 = sld [smem:[#allocation0]]
  $region22: #{lstm_model_forward.9} parent=0
    _
  %s6 = ssub.s32 1, %s4
  %s7 = scalar_select 0, %s6, %s4
  // Predicated region
  $region2: #{lstm_model_forward.9} parent=0 // pred_check
    _
  $region3: #{lstm_model_forward.9} parent=0 // pred_check_branch
    %9 = sbr.rel (0) target = $region5
  $region4: #{lstm_model_forward.9} parent=0 // pred_region
    _
  $region5: #{lstm_model_forward.9} parent=0 // pred_fallthru
    _
  // Predicated region
  $region6: #{lstm_model_forward.9} parent=0 // pred_check
    _
  $region7: #{lstm_model_forward.9} parent=0 // pred_check_branch
    %11 = sbr.rel (0) target = $region9
  $region8: #{lstm_model_forward.9} parent=0 // pred_region
    _
  $region9: #{lstm_model_forward.9} parent=0 // pred_fallthru
    _
  // Predicated region
  $region10: #{lstm_model_forward.9} parent=0 // pred_check
    _
  $region11: #{lstm_model_forward.9} parent=0 // pred_check_branch
    %13 = sbr.rel (0) target = $region13
  $region12: #{lstm_model_forward.9} parent=0 // pred_region
    _
  $region13: #{lstm_model_forward.9} parent=0 // pred_fallthru
    _
  %v15 = vld [vmem:[%s0] sm:$0xf]
  %v16 = vld [vmem:[%s0 + $0x4] sm:$0xf]
  %v17 = vld [vmem:[%s0 + $0x8] sm:$0xf]
  %v18 = vld [vmem:[%s0 + $0xc] sm:$0xf]
  %v19 = vld [vmem:[%s0 + $0x10] sm:$0xf]
  %v20 = vld [vmem:[%s0 + $0x14] sm:$0xf]
  %v21 = vld [vmem:[%s0 + $0x18] sm:$0xf]
  %v22 = vld [vmem:[%s0 + $0x1c] sm:$0xf]
  %v23 = vld [vmem:[%s1] sm:$0xf]
  %v24 = vld [vmem:[%s1 + $0x4] sm:$0xf]
  %v25 = vld [vmem:[%s1 + $0x8] sm:$0xf]
  %v26 = vld [vmem:[%s1 + $0xc] sm:$0xf]
  %v27 = vld [vmem:[%s2] sm:$0x1]
  %v29 = vlaneseq
  %v30 = vshrl.u32 %v29, 7
  %v31 = vsub.s32 0, %v30
  %v32 = vrot.slane %v27, %v31
  %v42 = vunpack.c.l.b16 %v15
  %v43 = vunpack.c.l.b16 %v16
  %v44 = vunpack.c.l.b16 %v17
  %v45 = vunpack.c.l.b16 %v18
  %v46 = vunpack.c.l.b16 %v19
  %v47 = vunpack.c.l.b16 %v20
  %v48 = vunpack.c.l.b16 %v21
  %v49 = vunpack.c.l.b16 %v22
  %v50 = vpack.c.b16 %v43, %v42
  %v51 = vpack.c.b16 %v45, %v44
  %v52 = vpack.c.b16 %v47, %v46
  %v53 = vpack.c.b16 %v49, %v48
  %v58 = vunpack.c.l.b16 %v23
  %v59 = vunpack.c.l.b16 %v24
  %v60 = vunpack.c.l.b16 %v25
  %v61 = vunpack.c.l.b16 %v26
  %v62 = vpack.c.b16 %v59, %v58
  %v63 = vpack.c.b16 %v61, %v60
  %vm66 = vcmask 261120
  %v68 = vsel %vm66, %v50, 0
  %v71 = vsel %vm66, %v51, 0
  %v74 = vsel %vm66, %v52, 0
  %v77 = vsel %vm66, %v53, 0
  %79 = vmatprep.subr.bf16.mxu0 0
  %80 = vmatpush1.bf16.msra.mxu0 0
  %81 = vmatprep.subr.bf16.mxu0 0
  %82 = vmatpush1.bf16.msra.mxu0 0
  %83 = vmatprep.subr.bf16.mxu0 0
  %84 = vmatpush1.bf16.msra.mxu0 0
  %85 = vmatprep.subr.bf16.mxu0 0
  %86 = vmatpush1.bf16.msra.mxu0 0
  %87 = vmatprep.subr.bf16.mxu0 0
  %88 = vmatpush1.bf16.msra.mxu0 0
  %89 = vmatprep.subr.bf16.mxu0 0
  %90 = vmatpush1.bf16.msra.mxu0 0
  %91 = vmatprep.subr.bf16.mxu0 0
  %92 = vmatpush1.bf16.msra.mxu0 %v63
  %93 = vmatprep.subr.bf16.mxu0 0
  %94 = vmatpush1.bf16.msra.mxu0 %v62
  %95 = vmatprep.subr.bf16.mxu0 0
  %96 = vmatpush2.bf16.msra.mxu0 0
  %97 = vmatprep.subr.bf16.mxu0 0
  %98 = vmatpush2.bf16.msra.mxu0 0
  %99 = vmatprep.subr.bf16.mxu0 0
  %100 = vmatpush2.bf16.msra.mxu0 0
  %101 = vmatprep.subr.bf16.mxu0 0
  %102 = vmatpush2.bf16.msra.mxu0 0
  %103 = vmatprep.subr.bf16.mxu0 0
  %104 = vmatpush2.bf16.msra.mxu0 0
  %105 = vmatprep.subr.bf16.mxu0 0
  %106 = vmatpush2.bf16.msra.mxu0 0
  %107 = vmatprep.subr.bf16.mxu0 0
  %108 = vmatpush2.bf16.msra.mxu0 0
  %109 = vmatprep.subr.bf16.mxu0 0
  %110 = vmatpush2.bf16.msra.mxu0 0
  %111 = vmatprep.mubr.bf16.mxu0 0
  %112 = vmatmul.mubr.bf16.gmra.mxu0 %v68
  %v113 = vpop.f32.mrf.mxu0
  %v114 = vadd.f32 %v32, %v113
  %v115 = vpop.f32.mrf.mxu0
  %v116 = vpop.f32.mrf.mxu0
  %v117 = vadd.f32 %v32, %v116
  %v118 = vpop.f32.mrf.mxu0
  %119 = vmatprep.mubr.bf16.mxu0 0
  %120 = vmatmul.mubr.bf16.gmra.mxu0 %v71
  %v121 = vpop.f32.mrf.mxu0
  %v122 = vadd.f32 %v32, %v121
  %v123 = vpop.f32.mrf.mxu0
  %v124 = vpop.f32.mrf.mxu0
  %v125 = vadd.f32 %v32, %v124
  %v126 = vpop.f32.mrf.mxu0
  %127 = vmatprep.mubr.bf16.mxu0 0
  %128 = vmatmul.mubr.bf16.gmra.mxu0 %v74
  %v129 = vpop.f32.mrf.mxu0
  %v130 = vadd.f32 %v32, %v129
  %v131 = vpop.f32.mrf.mxu0
  %v132 = vpop.f32.mrf.mxu0
  %v133 = vadd.f32 %v32, %v132
  %v134 = vpop.f32.mrf.mxu0
  %135 = vmatprep.mubr.bf16.mxu0 0
  %136 = vmatmul.mubr.bf16.gmra.mxu0 %v77
  %v137 = vpop.f32.mrf.mxu0
  %v138 = vadd.f32 %v32, %v137
  %v139 = vpop.f32.mrf.mxu0
  %v140 = vpop.f32.mrf.mxu0
  %v141 = vadd.f32 %v32, %v140
  %v142 = vpop.f32.mrf.mxu0
  %143 = vdwg.mxu0
  %vm144 = vcmask 130048
  %145 = vst.msk [vmem:[%s3] sm:$0xff] %vm144, %v114
  %146 = vst.msk [vmem:[%s3 + $0x8] sm:$0xff] %vm144, %v117
  %147 = vst.msk [vmem:[%s3 + $0x10] sm:$0xff] %vm144, %v122
  %148 = vst.msk [vmem:[%s3 + $0x18] sm:$0xff] %vm144, %v125
  %149 = vst.msk [vmem:[%s3 + $0x20] sm:$0xff] %vm144, %v130
  %150 = vst.msk [vmem:[%s3 + $0x28] sm:$0xff] %vm144, %v133
  %151 = vst.msk [vmem:[%s3 + $0x30] sm:$0xff] %vm144, %v138
  %152 = vst.msk [vmem:[%s3 + $0x38] sm:$0xff] %vm144, %v141
  // Predicated region
  $region14: #{lstm_model_forward.9} parent=0 // pred_check
    _
  $region15: #{lstm_model_forward.9} parent=0 // pred_check_branch
    %154 = sbr.rel (0) target = $region17
  $region16: #{lstm_model_forward.9} parent=0 // pred_region
    _
  $region17: #{lstm_model_forward.9} parent=0 // pred_fallthru
    _
  // Predicated region
  $region18: #{lstm_model_forward.9} parent=0 // pred_check
    _
  $region19: #{lstm_model_forward.9} parent=0 // pred_check_branch
    %156 = sbr.rel (0) target = $region21
  $region20: #{lstm_model_forward.9} parent=0 // pred_region
    _
  $region21: #{lstm_model_forward.9} parent=0 // pred_fallthru
    _

// kernel: lstm_model_forward.6
$region0: #{lstm_model_forward.6}
  #allocation0 [shape = 'u32[]', space=smem, size = 0x4, offset = 0x4, fixed_abs, tag = 'smem constant byte address 0x4 - core index']
  #allocation1 [shape = 'u32[144,128]{1,0:T(1,128)}', space=vmem, size = 0x12000, scoped, tag = 'internal scratch']
  %s0 = inlined_call_operand.vmem [shape: bf16[8,8,128], index: 0, kind: input, shape index: {}]
  %s1 = inlined_call_operand.vmem [shape: f32[32,128], index: 1, kind: input, shape index: {}]
  %s2 = inlined_call_operand.vmem [shape: bf16[8,8,32], index: 2, kind: output, shape index: {0}]
  %s3 = inlined_call_operand.vmem [shape: f32[8,32], index: 3, kind: output, shape index: {1}]
  %s4 = inlined_call_operand.vmem [shape: f32[8,32], index: 4, kind: output, shape index: {2}]
  %5 = xla_tuple %s2, %s3, %s4
  %s6 = sld [smem:[#allocation0]]
  $region38: #{lstm_model_forward.6} parent=0
    _
  %s8 = ssub.s32 1, %s6
  %s9 = scalar_select 0, %s8, %s6
  // Predicated region
  $region2: #{lstm_model_forward.6} parent=0 // pred_check
    _
  $region3: #{lstm_model_forward.6} parent=0 // pred_check_branch
    %11 = sbr.rel (0) target = $region5
  $region4: #{lstm_model_forward.6} parent=0 // pred_region
    _
  $region5: #{lstm_model_forward.6} parent=0 // pred_fallthru
    _
  // Predicated region
  $region6: #{lstm_model_forward.6} parent=0 // pred_check
    _
  $region7: #{lstm_model_forward.6} parent=0 // pred_check_branch
    %13 = sbr.rel (0) target = $region9
  $region8: #{lstm_model_forward.6} parent=0 // pred_region
    _
  $region9: #{lstm_model_forward.6} parent=0 // pred_fallthru
    _
  %p14 = scmp.eq.s32.totalorder 0, 0
  // Predicated region
  $region10: #{lstm_model_forward.6} parent=0 // pred_check
    %p15 = pneg %p14
  $region11: #{lstm_model_forward.6} parent=0 // pred_check_branch
    %17 = sbr.rel (%p15) target = $region13
  $region12: #{lstm_model_forward.6} parent=0 // pred_region
    %vm18 = vcmask 261120
    %19 = vst.msk [vmem:[%s3] sm:$0xff] %vm18, 0.0
    %20 = vst.msk [vmem:[%s4] sm:$0xff] %vm18, 0.0
  $region13: #{lstm_model_forward.6} parent=0 // pred_fallthru
    _
  %v21 = vld [vmem:[%s1] sm:$0xff]
  %v22 = vld [vmem:[%s1 + $0x8] sm:$0xff]
  %v23 = vld [vmem:[%s1 + $0x10] sm:$0xff]
  %v24 = vld [vmem:[%s1 + $0x18] sm:$0xff]
  %v25 = vld [vmem:[%s3] sm:$0xff]
  %v26 = vld [vmem:[%s4] sm:$0xff]
  %v27 = vld [vmem:[%s0] sm:$0xf]
  %v28 = vunpack.c.l.bf16 %v27
  %vm29 = vcmask 261120
  %v31 = vsel %vm29, %v25, 0
  %33 = vmatprep.subr.mxu0 0.0
  %34 = vmatpush1.msra.mxu0 0.0
  %35 = vmatprep.subr.mxu0 0.0
  %36 = vmatpush1.msra.mxu0 0.0
  %37 = vmatprep.subr.mxu0 0.0
  %38 = vmatpush1.msra.mxu0 0.0
  %39 = vmatprep.subr.mxu0 0.0
  %40 = vmatpush1.msra.mxu0 0.0
  %41 = vmatprep.subr.mxu0 0.0
  %42 = vmatpush1.msra.mxu0 0.0
  %43 = vmatprep.subr.mxu0 0.0
  %44 = vmatpush1.msra.mxu0 0.0
  %45 = vmatprep.subr.mxu0 0.0
  %46 = vmatpush1.msra.mxu0 0.0
  %47 = vmatprep.subr.mxu0 0.0
  %48 = vmatpush1.msra.mxu0 0.0
  %49 = vmatprep.subr.mxu0 0.0
  %50 = vmatpush1.msra.mxu0 0.0
  %51 = vmatprep.subr.mxu0 0.0
  %52 = vmatpush1.msra.mxu0 0.0
  %53 = vmatprep.subr.mxu0 0.0
  %54 = vmatpush1.msra.mxu0 0.0
  %55 = vmatprep.subr.mxu0 0.0
  %56 = vmatpush1.msra.mxu0 0.0
  %57 = vmatprep.subr.mxu0 0.0
  %58 = vmatpush1.msra.mxu0 %v24
  %59 = vmatprep.subr.mxu0 0.0
  %60 = vmatpush1.msra.mxu0 %v23
  %61 = vmatprep.subr.mxu0 0.0
  %62 = vmatpush1.msra.mxu0 %v22
  %63 = vmatprep.subr.mxu0 0.0
  %64 = vmatpush1.msra.mxu0 %v21
  %65 = vmatprep.subr.mxu0 0.0
  %66 = vmatpush2.msra.mxu0 0.0
  %67 = vmatprep.subr.mxu0 0.0
  %68 = vmatpush2.msra.mxu0 0.0
  %69 = vmatprep.subr.mxu0 0.0
  %70 = vmatpush2.msra.mxu0 0.0
  %71 = vmatprep.subr.mxu0 0.0
  %72 = vmatpush2.msra.mxu0 0.0
  %73 = vmatprep.subr.mxu0 0.0
  %74 = vmatpush2.msra.mxu0 0.0
  %75 = vmatprep.subr.mxu0 0.0
  %76 = vmatpush2.msra.mxu0 0.0
  %77 = vmatprep.subr.mxu0 0.0
  %78 = vmatpush2.msra.mxu0 0.0
  %79 = vmatprep.subr.mxu0 0.0
  %80 = vmatpush2.msra.mxu0 0.0
  %81 = vmatprep.subr.mxu0 0.0
  %82 = vmatpush2.msra.mxu0 0.0
  %83 = vmatprep.subr.mxu0 0.0
  %84 = vmatpush2.msra.mxu0 0.0
  %85 = vmatprep.subr.mxu0 0.0
  %86 = vmatpush2.msra.mxu0 0.0
  %87 = vmatprep.subr.mxu0 0.0
  %88 = vmatpush2.msra.mxu0 0.0
  %89 = vmatprep.subr.mxu0 0.0
  %90 = vmatpush2.msra.mxu0 0.0
  %91 = vmatprep.subr.mxu0 0.0
  %92 = vmatpush2.msra.mxu0 0.0
  %93 = vmatprep.subr.mxu0 0.0
  %94 = vmatpush2.msra.mxu0 0.0
  %95 = vmatprep.subr.mxu0 0.0
  %96 = vmatpush2.msra.mxu0 0.0
  %97 = vmatprep.mubr.f32.mxu0 0.0
  %98 = vmatmul.mubr.f32.gmra.mxu0 %v31
  %v99 = vpop.f32.mrf.mxu0
  %v100 = vadd.f32 0.0, %v99
  %v101 = vpop.f32.mrf.mxu0
  %102 = vdwg.mxu0
  %v103 = vadd.f32 %v28, %v100
  %v104 = vxor.u32 %v103, 2147483648
  %v105 = vmul.f32 %v104, 1.442695
  %v106 = vpow.pop %v105
  %v107 = vadd.f32 %v106, 1.0
  %v108 = vrcp.pop %v107
  %v109 = vmul.f32 1.0, %v108
  %v110 = vtanh.pop %v103
  %112 = vrot.lane.b32.xlu0 %v26, 32
  %v113 = vpop.permute.xlu0 %112
  %v115 = vmul.f32 %v109, %v113
  %117 = vrot.lane.b32.xlu0 %v110, 64
  %v118 = vpop.permute.xlu0 %117
  %v120 = vmul.f32 %v109, %v118
  %122 = vrot.lane.b32.xlu0 %v120, 32
  %v123 = vpop.permute.xlu0 %122
  %v125 = vadd.f32 %v115, %v123
  %v126 = vtanh.pop %v125
  %128 = vrot.lane.b32.xlu0 %v126, 64
  %v129 = vpop.permute.xlu0 %128
  %v131 = vmul.f32 %v109, %v129
  %v132 = vpack.c.bf16 %v131, %v131
  %v134 = vunpack.c.l.b16 %v132
  %v135 = vpack.c.b16 %v134, %v134
  %136 = vrot.lane.b32.xlu0 %v135, 32
  %v137 = vpop.permute.xlu0 %136
  %vm139 = vcmask 257024
  %140 = vst.msk [vmem:[%s2] sm:$0xf] %vm139, %v137
  %s141 = scalar_lea.vmem %s0, 4
  %v142 = vld [vmem:[%s141] sm:$0xf]
  %v143 = vunpack.c.l.bf16 %v142
  %145 = vrot.lane.b32.xlu0 %v131, 32
  %v146 = vpop.permute.xlu0 %145
  %v147 = vsel %vm29, %v146, 0
  %149 = vmatprep.subr.mxu0 0.0
  %150 = vmatpush1.msra.mxu0 0.0
  %151 = vmatprep.subr.mxu0 0.0
  %152 = vmatpush1.msra.mxu0 0.0
  %153 = vmatprep.subr.mxu0 0.0
  %154 = vmatpush1.msra.mxu0 0.0
  %155 = vmatprep.subr.mxu0 0.0
  %156 = vmatpush1.msra.mxu0 0.0
  %157 = vmatprep.subr.mxu0 0.0
  %158 = vmatpush1.msra.mxu0 0.0
  %159 = vmatprep.subr.mxu0 0.0
  %160 = vmatpush1.msra.mxu0 0.0
  %161 = vmatprep.subr.mxu0 0.0
  %162 = vmatpush1.msra.mxu0 0.0
  %163 = vmatprep.subr.mxu0 0.0
  %164 = vmatpush1.msra.mxu0 0.0
  %165 = vmatprep.subr.mxu0 0.0
  %166 = vmatpush1.msra.mxu0 0.0
  %167 = vmatprep.subr.mxu0 0.0
  %168 = vmatpush1.msra.mxu0 0.0
  %169 = vmatprep.subr.mxu0 0.0
  %170 = vmatpush1.msra.mxu0 0.0
  %171 = vmatprep.subr.mxu0 0.0
  %172 = vmatpush1.msra.mxu0 0.0
  %173 = vmatprep.subr.mxu0 0.0
  %174 = vmatpush1.msra.mxu0 %v24
  %175 = vmatprep.subr.mxu0 0.0
  %176 = vmatpush1.msra.mxu0 %v23
  %177 = vmatprep.subr.mxu0 0.0
  %178 = vmatpush1.msra.mxu0 %v22
  %179 = vmatprep.subr.mxu0 0.0
  %180 = vmatpush1.msra.mxu0 %v21
  %181 = vmatprep.subr.mxu0 0.0
  %182 = vmatpush2.msra.mxu0 0.0
  %183 = vmatprep.subr.mxu0 0.0
  %184 = vmatpush2.msra.mxu0 0.0
  %185 = vmatprep.subr.mxu0 0.0
  %186 = vmatpush2.msra.mxu0 0.0
  %187 = vmatprep.subr.mxu0 0.0
  %188 = vmatpush2.msra.mxu0 0.0
  %189 = vmatprep.subr.mxu0 0.0
  %190 = vmatpush2.msra.mxu0 0.0
  %191 = vmatprep.subr.mxu0 0.0
  %192 = vmatpush2.msra.mxu0 0.0
  %193 = vmatprep.subr.mxu0 0.0
  %194 = vmatpush2.msra.mxu0 0.0
  %195 = vmatprep.subr.mxu0 0.0
  %196 = vmatpush2.msra.mxu0 0.0
  %197 = vmatprep.subr.mxu0 0.0
  %198 = vmatpush2.msra.mxu0 0.0
  %199 = vmatprep.subr.mxu0 0.0
  %200 = vmatpush2.msra.mxu0 0.0
  %201 = vmatprep.subr.mxu0 0.0
  %202 = vmatpush2.msra.mxu0 0.0
  %203 = vmatprep.subr.mxu0 0.0
  %204 = vmatpush2.msra.mxu0 0.0
  %205 = vmatprep.subr.mxu0 0.0
  %206 = vmatpush2.msra.mxu0 0.0
  %207 = vmatprep.subr.mxu0 0.0
  %208 = vmatpush2.msra.mxu0 0.0
  %209 = vmatprep.subr.mxu0 0.0
  %210 = vmatpush2.msra.mxu0 0.0
  %211 = vmatprep.subr.mxu0 0.0
  %212 = vmatpush2.msra.mxu0 0.0
  %213 = vmatprep.mubr.f32.mxu0 0.0
  %214 = vmatmul.mubr.f32.gmra.mxu0 %v147
  %v215 = vpop.f32.mrf.mxu0
  %v216 = vadd.f32 0.0, %v215
  %v217 = vpop.f32.mrf.mxu0
  %218 = vdwg.mxu0
  %v219 = vadd.f32 %v143, %v216
  %v220 = vxor.u32 %v219, 2147483648
  %v221 = vmul.f32 %v220, 1.442695
  %v222 = vpow.pop %v221
  %v223 = vadd.f32 %v222, 1.0
  %v224 = vrcp.pop %v223
  %v225 = vmul.f32 1.0, %v224
  %v226 = vtanh.pop %v219
  %v227 = vmul.f32 %v225, %v125
  %229 = vrot.lane.b32.xlu0 %v226, 64
  %v230 = vpop.permute.xlu0 %229
  %v232 = vmul.f32 %v225, %v230
  %234 = vrot.lane.b32.xlu0 %v232, 32
  %v235 = vpop.permute.xlu0 %234
  %v237 = vadd.f32 %v227, %v235
  %v238 = vtanh.pop %v237
  %240 = vrot.lane.b32.xlu0 %v238, 64
  %v241 = vpop.permute.xlu0 %240
  %v243 = vmul.f32 %v225, %v241
  %v244 = vpack.c.bf16 %v243, %v243
  %v246 = vunpack.c.l.b16 %v244
  %v247 = vpack.c.b16 %v246, %v246
  %248 = vrot.lane.b32.xlu0 %v247, 32
  %v249 = vpop.permute.xlu0 %248
  %s251 = scalar_lea.vmem %s2, 4
  %252 = vst.msk [vmem:[%s251] sm:$0xf] %vm139, %v249
  %s253 = scalar_lea.vmem %s0, 8
  %v254 = vld [vmem:[%s253] sm:$0xf]
  %v255 = vunpack.c.l.bf16 %v254
  %257 = vrot.lane.b32.xlu0 %v243, 32
  %v258 = vpop.permute.xlu0 %257
  %v259 = vsel %vm29, %v258, 0
  %261 = vmatprep.subr.mxu0 0.0
  %262 = vmatpush1.msra.mxu0 0.0
  %263 = vmatprep.subr.mxu0 0.0
  %264 = vmatpush1.msra.mxu0 0.0
  %265 = vmatprep.subr.mxu0 0.0
  %266 = vmatpush1.msra.mxu0 0.0
  %267 = vmatprep.subr.mxu0 0.0
  %268 = vmatpush1.msra.mxu0 0.0
  %269 = vmatprep.subr.mxu0 0.0
  %270 = vmatpush1.msra.mxu0 0.0
  %271 = vmatprep.subr.mxu0 0.0
  %272 = vmatpush1.msra.mxu0 0.0
  %273 = vmatprep.subr.mxu0 0.0
  %274 = vmatpush1.msra.mxu0 0.0
  %275 = vmatprep.subr.mxu0 0.0
  %276 = vmatpush1.msra.mxu0 0.0
  %277 = vmatprep.subr.mxu0 0.0
  %278 = vmatpush1.msra.mxu0 0.0
  %279 = vmatprep.subr.mxu0 0.0
  %280 = vmatpush1.msra.mxu0 0.0
  %281 = vmatprep.subr.mxu0 0.0
  %282 = vmatpush1.msra.mxu0 0.0
  %283 = vmatprep.subr.mxu0 0.0
  %284 = vmatpush1.msra.mxu0 0.0
  %285 = vmatprep.subr.mxu0 0.0
  %286 = vmatpush1.msra.mxu0 %v24
  %287 = vmatprep.subr.mxu0 0.0
  %288 = vmatpush1.msra.mxu0 %v23
  %289 = vmatprep.subr.mxu0 0.0
  %290 = vmatpush1.msra.mxu0 %v22
  %291 = vmatprep.subr.mxu0 0.0
  %292 = vmatpush1.msra.mxu0 %v21
  %293 = vmatprep.subr.mxu0 0.0
  %294 = vmatpush2.msra.mxu0 0.0
  %295 = vmatprep.subr.mxu0 0.0
  %296 = vmatpush2.msra.mxu0 0.0
  %297 = vmatprep.subr.mxu0 0.0
  %298 = vmatpush2.msra.mxu0 0.0
  %299 = vmatprep.subr.mxu0 0.0
  %300 = vmatpush2.msra.mxu0 0.0
  %301 = vmatprep.subr.mxu0 0.0
  %302 = vmatpush2.msra.mxu0 0.0
  %303 = vmatprep.subr.mxu0 0.0
  %304 = vmatpush2.msra.mxu0 0.0
  %305 = vmatprep.subr.mxu0 0.0
  %306 = vmatpush2.msra.mxu0 0.0
  %307 = vmatprep.subr.mxu0 0.0
  %308 = vmatpush2.msra.mxu0 0.0
  %309 = vmatprep.subr.mxu0 0.0
  %310 = vmatpush2.msra.mxu0 0.0
  %311 = vmatprep.subr.mxu0 0.0
  %312 = vmatpush2.msra.mxu0 0.0
  %313 = vmatprep.subr.mxu0 0.0
  %314 = vmatpush2.msra.mxu0 0.0
  %315 = vmatprep.subr.mxu0 0.0
  %316 = vmatpush2.msra.mxu0 0.0
  %317 = vmatprep.subr.mxu0 0.0
  %318 = vmatpush2.msra.mxu0 0.0
  %319 = vmatprep.subr.mxu0 0.0
  %320 = vmatpush2.msra.mxu0 0.0
  %321 = vmatprep.subr.mxu0 0.0
  %322 = vmatpush2.msra.mxu0 0.0
  %323 = vmatprep.subr.mxu0 0.0
  %324 = vmatpush2.msra.mxu0 0.0
  %325 = vmatprep.mubr.f32.mxu0 0.0
  %326 = vmatmul.mubr.f32.gmra.mxu0 %v259
  %v327 = vpop.f32.mrf.mxu0
  %v328 = vadd.f32 0.0, %v327
  %v329 = vpop.f32.mrf.mxu0
  %330 = vdwg.mxu0
  %v331 = vadd.f32 %v255, %v328
  %v332 = vxor.u32 %v331, 2147483648
  %v333 = vmul.f32 %v332, 1.442695
  %v334 = vpow.pop %v333
  %v335 = vadd.f32 %v334, 1.0
  %v336 = vrcp.pop %v335
  %v337 = vmul.f32 1.0, %v336
  %v338 = vtanh.pop %v331
  %v339 = vmul.f32 %v337, %v237
  %341 = vrot.lane.b32.xlu0 %v338, 64
  %v342 = vpop.permute.xlu0 %341
  %v344 = vmul.f32 %v337, %v342
  %346 = vrot.lane.b32.xlu0 %v344, 32
  %v347 = vpop.permute.xlu0 %346
  %v349 = vadd.f32 %v339, %v347
  %v350 = vtanh.pop %v349
  %352 = vrot.lane.b32.xlu0 %v350, 64
  %v353 = vpop.permute.xlu0 %352
  %v355 = vmul.f32 %v337, %v353
  %v356 = vpack.c.bf16 %v355, %v355
  %v358 = vunpack.c.l.b16 %v356
  %v359 = vpack.c.b16 %v358, %v358
  %360 = vrot.lane.b32.xlu0 %v359, 32
  %v361 = vpop.permute.xlu0 %360
  %s363 = scalar_lea.vmem %s2, 8
  %364 = vst.msk [vmem:[%s363] sm:$0xf] %vm139, %v361
  %s365 = scalar_lea.vmem %s0, 12
  %v366 = vld [vmem:[%s365] sm:$0xf]
  %v367 = vunpack.c.l.bf16 %v366
  %369 = vrot.lane.b32.xlu0 %v355, 32
  %v370 = vpop.permute.xlu0 %369
  %v371 = vsel %vm29, %v370, 0
  %373 = vmatprep.subr.mxu0 0.0
  %374 = vmatpush1.msra.mxu0 0.0
  %375 = vmatprep.subr.mxu0 0.0
  %376 = vmatpush1.msra.mxu0 0.0
  %377 = vmatprep.subr.mxu0 0.0
  %378 = vmatpush1.msra.mxu0 0.0
  %379 = vmatprep.subr.mxu0 0.0
  %380 = vmatpush1.msra.mxu0 0.0
  %381 = vmatprep.subr.mxu0 0.0
  %382 = vmatpush1.msra.mxu0 0.0
  %383 = vmatprep.subr.mxu0 0.0
  %384 = vmatpush1.msra.mxu0 0.0
  %385 = vmatprep.subr.mxu0 0.0
  %386 = vmatpush1.msra.mxu0 0.0
  %387 = vmatprep.subr.mxu0 0.0
  %388 = vmatpush1.msra.mxu0 0.0
  %389 = vmatprep.subr.mxu0 0.0
  %390 = vmatpush1.msra.mxu0 0.0
  %391 = vmatprep.subr.mxu0 0.0
  %392 = vmatpush1.msra.mxu0 0.0
  %393 = vmatprep.subr.mxu0 0.0
  %394 = vmatpush1.msra.mxu0 0.0
  %395 = vmatprep.subr.mxu0 0.0
  %396 = vmatpush1.msra.mxu0 0.0
  %397 = vmatprep.subr.mxu0 0.0
  %398 = vmatpush1.msra.mxu0 %v24
  %399 = vmatprep.subr.mxu0 0.0
  %400 = vmatpush1.msra.mxu0 %v23
  %401 = vmatprep.subr.mxu0 0.0
  %402 = vmatpush1.msra.mxu0 %v22
  %403 = vmatprep.subr.mxu0 0.0
  %404 = vmatpush1.msra.mxu0 %v21
  %405 = vmatprep.subr.mxu0 0.0
  %406 = vmatpush2.msra.mxu0 0.0
  %407 = vmatprep.subr.mxu0 0.0
  %408 = vmatpush2.msra.mxu0 0.0
  %409 = vmatprep.subr.mxu0 0.0
  %410 = vmatpush2.msra.mxu0 0.0
  %411 = vmatprep.subr.mxu0 0.0
  %412 = vmatpush2.msra.mxu0 0.0
  %413 = vmatprep.subr.mxu0 0.0
  %414 = vmatpush2.msra.mxu0 0.0
  %415 = vmatprep.subr.mxu0 0.0
  %416 = vmatpush2.msra.mxu0 0.0
  %417 = vmatprep.subr.mxu0 0.0
  %418 = vmatpush2.msra.mxu0 0.0
  %419 = vmatprep.subr.mxu0 0.0
  %420 = vmatpush2.msra.mxu0 0.0
  %421 = vmatprep.subr.mxu0 0.0
  %422 = vmatpush2.msra.mxu0 0.0
  %423 = vmatprep.subr.mxu0 0.0
  %424 = vmatpush2.msra.mxu0 0.0
  %425 = vmatprep.subr.mxu0 0.0
  %426 = vmatpush2.msra.mxu0 0.0
  %427 = vmatprep.subr.mxu0 0.0
  %428 = vmatpush2.msra.mxu0 0.0
  %429 = vmatprep.subr.mxu0 0.0
  %430 = vmatpush2.msra.mxu0 0.0
  %431 = vmatprep.subr.mxu0 0.0
  %432 = vmatpush2.msra.mxu0 0.0
  %433 = vmatprep.subr.mxu0 0.0
  %434 = vmatpush2.msra.mxu0 0.0
  %435 = vmatprep.subr.mxu0 0.0
  %436 = vmatpush2.msra.mxu0 0.0
  %437 = vmatprep.mubr.f32.mxu0 0.0
  %438 = vmatmul.mubr.f32.gmra.mxu0 %v371
  %v439 = vpop.f32.mrf.mxu0
  %v440 = vadd.f32 0.0, %v439
  %v441 = vpop.f32.mrf.mxu0
  %442 = vdwg.mxu0
  %v443 = vadd.f32 %v367, %v440
  %v444 = vxor.u32 %v443, 2147483648
  %v445 = vmul.f32 %v444, 1.442695
  %v446 = vpow.pop %v445
  %v447 = vadd.f32 %v446, 1.0
  %v448 = vrcp.pop %v447
  %v449 = vmul.f32 1.0, %v448
  %v450 = vtanh.pop %v443
  %v451 = vmul.f32 %v449, %v349
  %453 = vrot.lane.b32.xlu0 %v450, 64
  %v454 = vpop.permute.xlu0 %453
  %v456 = vmul.f32 %v449, %v454
  %458 = vrot.lane.b32.xlu0 %v456, 32
  %v459 = vpop.permute.xlu0 %458
  %v461 = vadd.f32 %v451, %v459
  %v462 = vtanh.pop %v461
  %464 = vrot.lane.b32.xlu0 %v462, 64
  %v465 = vpop.permute.xlu0 %464
  %v467 = vmul.f32 %v449, %v465
  %v468 = vpack.c.bf16 %v467, %v467
  %v470 = vunpack.c.l.b16 %v468
  %v471 = vpack.c.b16 %v470, %v470
  %472 = vrot.lane.b32.xlu0 %v471, 32
  %v473 = vpop.permute.xlu0 %472
  %s475 = scalar_lea.vmem %s2, 12
  %476 = vst.msk [vmem:[%s475] sm:$0xf] %vm139, %v473
  %s477 = scalar_lea.vmem %s0, 16
  %v478 = vld [vmem:[%s477] sm:$0xf]
  %v479 = vunpack.c.l.bf16 %v478
  %481 = vrot.lane.b32.xlu0 %v467, 32
  %v482 = vpop.permute.xlu0 %481
  %v483 = vsel %vm29, %v482, 0
  %485 = vmatprep.subr.mxu0 0.0
  %486 = vmatpush1.msra.mxu0 0.0
  %487 = vmatprep.subr.mxu0 0.0
  %488 = vmatpush1.msra.mxu0 0.0
  %489 = vmatprep.subr.mxu0 0.0
  %490 = vmatpush1.msra.mxu0 0.0
  %491 = vmatprep.subr.mxu0 0.0
  %492 = vmatpush1.msra.mxu0 0.0
  %493 = vmatprep.subr.mxu0 0.0
  %494 = vmatpush1.msra.mxu0 0.0
  %495 = vmatprep.subr.mxu0 0.0
  %496 = vmatpush1.msra.mxu0 0.0
  %497 = vmatprep.subr.mxu0 0.0
  %498 = vmatpush1.msra.mxu0 0.0
  %499 = vmatprep.subr.mxu0 0.0
  %500 = vmatpush1.msra.mxu0 0.0
  %501 = vmatprep.subr.mxu0 0.0
  %502 = vmatpush1.msra.mxu0 0.0
  %503 = vmatprep.subr.mxu0 0.0
  %504 = vmatpush1.msra.mxu0 0.0
  %505 = vmatprep.subr.mxu0 0.0
  %506 = vmatpush1.msra.mxu0 0.0
  %507 = vmatprep.subr.mxu0 0.0
  %508 = vmatpush1.msra.mxu0 0.0
  %509 = vmatprep.subr.mxu0 0.0
  %510 = vmatpush1.msra.mxu0 %v24
  %511 = vmatprep.subr.mxu0 0.0
  %512 = vmatpush1.msra.mxu0 %v23
  %513 = vmatprep.subr.mxu0 0.0
  %514 = vmatpush1.msra.mxu0 %v22
  %515 = vmatprep.subr.mxu0 0.0
  %516 = vmatpush1.msra.mxu0 %v21
  %517 = vmatprep.subr.mxu0 0.0
  %518 = vmatpush2.msra.mxu0 0.0
  %519 = vmatprep.subr.mxu0 0.0
  %520 = vmatpush2.msra.mxu0 0.0
  %521 = vmatprep.subr.mxu0 0.0
  %522 = vmatpush2.msra.mxu0 0.0
  %523 = vmatprep.subr.mxu0 0.0
  %524 = vmatpush2.msra.mxu0 0.0
  %525 = vmatprep.subr.mxu0 0.0
  %526 = vmatpush2.msra.mxu0 0.0
  %527 = vmatprep.subr.mxu0 0.0
  %528 = vmatpush2.msra.mxu0 0.0
  %529 = vmatprep.subr.mxu0 0.0
  %530 = vmatpush2.msra.mxu0 0.0
  %531 = vmatprep.subr.mxu0 0.0
  %532 = vmatpush2.msra.mxu0 0.0
  %533 = vmatprep.subr.mxu0 0.0
  %534 = vmatpush2.msra.mxu0 0.0
  %535 = vmatprep.subr.mxu0 0.0
  %536 = vmatpush2.msra.mxu0 0.0
  %537 = vmatprep.subr.mxu0 0.0
  %538 = vmatpush2.msra.mxu0 0.0
  %539 = vmatprep.subr.mxu0 0.0
  %540 = vmatpush2.msra.mxu0 0.0
  %541 = vmatprep.subr.mxu0 0.0
  %542 = vmatpush2.msra.mxu0 0.0
  %543 = vmatprep.subr.mxu0 0.0
  %544 = vmatpush2.msra.mxu0 0.0
  %545 = vmatprep.subr.mxu0 0.0
  %546 = vmatpush2.msra.mxu0 0.0
  %547 = vmatprep.subr.mxu0 0.0
  %548 = vmatpush2.msra.mxu0 0.0
  %549 = vmatprep.mubr.f32.mxu0 0.0
  %550 = vmatmul.mubr.f32.gmra.mxu0 %v483
  %v551 = vpop.f32.mrf.mxu0
  %v552 = vadd.f32 0.0, %v551
  %v553 = vpop.f32.mrf.mxu0
  %554 = vdwg.mxu0
  %v555 = vadd.f32 %v479, %v552
  %v556 = vxor.u32 %v555, 2147483648
  %v557 = vmul.f32 %v556, 1.442695
  %v558 = vpow.pop %v557
  %v559 = vadd.f32 %v558, 1.0
  %v560 = vrcp.pop %v559
  %v561 = vmul.f32 1.0, %v560
  %v562 = vtanh.pop %v555
  %v563 = vmul.f32 %v561, %v461
  %565 = vrot.lane.b32.xlu0 %v562, 64
  %v566 = vpop.permute.xlu0 %565
  %v568 = vmul.f32 %v561, %v566
  %570 = vrot.lane.b32.xlu0 %v568, 32
  %v571 = vpop.permute.xlu0 %570
  %v573 = vadd.f32 %v563, %v571
  %v574 = vtanh.pop %v573
  %576 = vrot.lane.b32.xlu0 %v574, 64
  %v577 = vpop.permute.xlu0 %576
  %v579 = vmul.f32 %v561, %v577
  %v580 = vpack.c.bf16 %v579, %v579
  %v582 = vunpack.c.l.b16 %v580
  %v583 = vpack.c.b16 %v582, %v582
  %584 = vrot.lane.b32.xlu0 %v583, 32
  %v585 = vpop.permute.xlu0 %584
  %s587 = scalar_lea.vmem %s2, 16
  %588 = vst.msk [vmem:[%s587] sm:$0xf] %vm139, %v585
  %s589 = scalar_lea.vmem %s0, 20
  %v590 = vld [vmem:[%s589] sm:$0xf]
  %v591 = vunpack.c.l.bf16 %v590
  %593 = vrot.lane.b32.xlu0 %v579, 32
  %v594 = vpop.permute.xlu0 %593
  %v595 = vsel %vm29, %v594, 0
  %597 = vmatprep.subr.mxu0 0.0
  %598 = vmatpush1.msra.mxu0 0.0
  %599 = vmatprep.subr.mxu0 0.0
  %600 = vmatpush1.msra.mxu0 0.0
  %601 = vmatprep.subr.mxu0 0.0
  %602 = vmatpush1.msra.mxu0 0.0
  %603 = vmatprep.subr.mxu0 0.0
  %604 = vmatpush1.msra.mxu0 0.0
  %605 = vmatprep.subr.mxu0 0.0
  %606 = vmatpush1.msra.mxu0 0.0
  %607 = vmatprep.subr.mxu0 0.0
  %608 = vmatpush1.msra.mxu0 0.0
  %609 = vmatprep.subr.mxu0 0.0
  %610 = vmatpush1.msra.mxu0 0.0
  %611 = vmatprep.subr.mxu0 0.0
  %612 = vmatpush1.msra.mxu0 0.0
  %613 = vmatprep.subr.mxu0 0.0
  %614 = vmatpush1.msra.mxu0 0.0
  %615 = vmatprep.subr.mxu0 0.0
  %616 = vmatpush1.msra.mxu0 0.0
  %617 = vmatprep.subr.mxu0 0.0
  %618 = vmatpush1.msra.mxu0 0.0
  %619 = vmatprep.subr.mxu0 0.0
  %620 = vmatpush1.msra.mxu0 0.0
  %621 = vmatprep.subr.mxu0 0.0
  %622 = vmatpush1.msra.mxu0 %v24
  %623 = vmatprep.subr.mxu0 0.0
  %624 = vmatpush1.msra.mxu0 %v23
  %625 = vmatprep.subr.mxu0 0.0
  %626 = vmatpush1.msra.mxu0 %v22
  %627 = vmatprep.subr.mxu0 0.0
  %628 = vmatpush1.msra.mxu0 %v21
  %629 = vmatprep.subr.mxu0 0.0
  %630 = vmatpush2.msra.mxu0 0.0
  %631 = vmatprep.subr.mxu0 0.0
  %632 = vmatpush2.msra.mxu0 0.0
  %633 = vmatprep.subr.mxu0 0.0
  %634 = vmatpush2.msra.mxu0 0.0
  %635 = vmatprep.subr.mxu0 0.0
  %636 = vmatpush2.msra.mxu0 0.0
  %637 = vmatprep.subr.mxu0 0.0
  %638 = vmatpush2.msra.mxu0 0.0
  %639 = vmatprep.subr.mxu0 0.0
  %640 = vmatpush2.msra.mxu0 0.0
  %641 = vmatprep.subr.mxu0 0.0
  %642 = vmatpush2.msra.mxu0 0.0
  %643 = vmatprep.subr.mxu0 0.0
  %644 = vmatpush2.msra.mxu0 0.0
  %645 = vmatprep.subr.mxu0 0.0
  %646 = vmatpush2.msra.mxu0 0.0
  %647 = vmatprep.subr.mxu0 0.0
  %648 = vmatpush2.msra.mxu0 0.0
  %649 = vmatprep.subr.mxu0 0.0
  %650 = vmatpush2.msra.mxu0 0.0
  %651 = vmatprep.subr.mxu0 0.0
  %652 = vmatpush2.msra.mxu0 0.0
  %653 = vmatprep.subr.mxu0 0.0
  %654 = vmatpush2.msra.mxu0 0.0
  %655 = vmatprep.subr.mxu0 0.0
  %656 = vmatpush2.msra.mxu0 0.0
  %657 = vmatprep.subr.mxu0 0.0
  %658 = vmatpush2.msra.mxu0 0.0
  %659 = vmatprep.subr.mxu0 0.0
  %660 = vmatpush2.msra.mxu0 0.0
  %661 = vmatprep.mubr.f32.mxu0 0.0
  %662 = vmatmul.mubr.f32.gmra.mxu0 %v595
  %v663 = vpop.f32.mrf.mxu0
  %v664 = vadd.f32 0.0, %v663
  %v665 = vpop.f32.mrf.mxu0
  %666 = vdwg.mxu0
  %v667 = vadd.f32 %v591, %v664
  %v668 = vxor.u32 %v667, 2147483648
  %v669 = vmul.f32 %v668, 1.442695
  %v670 = vpow.pop %v669
  %v671 = vadd.f32 %v670, 1.0
  %v672 = vrcp.pop %v671
  %v673 = vmul.f32 1.0, %v672
  %v674 = vtanh.pop %v667
  %v675 = vmul.f32 %v673, %v573
  %677 = vrot.lane.b32.xlu0 %v674, 64
  %v678 = vpop.permute.xlu0 %677
  %v680 = vmul.f32 %v673, %v678
  %682 = vrot.lane.b32.xlu0 %v680, 32
  %v683 = vpop.permute.xlu0 %682
  %v685 = vadd.f32 %v675, %v683
  %v686 = vtanh.pop %v685
  %688 = vrot.lane.b32.xlu0 %v686, 64
  %v689 = vpop.permute.xlu0 %688
  %v691 = vmul.f32 %v673, %v689
  %v692 = vpack.c.bf16 %v691, %v691
  %v694 = vunpack.c.l.b16 %v692
  %v695 = vpack.c.b16 %v694, %v694
  %696 = vrot.lane.b32.xlu0 %v695, 32
  %v697 = vpop.permute.xlu0 %696
  %s699 = scalar_lea.vmem %s2, 20
  %700 = vst.msk [vmem:[%s699] sm:$0xf] %vm139, %v697
  %s701 = scalar_lea.vmem %s0, 24
  %v702 = vld [vmem:[%s701] sm:$0xf]
  %v703 = vunpack.c.l.bf16 %v702
  %705 = vrot.lane.b32.xlu0 %v691, 32
  %v706 = vpop.permute.xlu0 %705
  %v707 = vsel %vm29, %v706, 0
  %709 = vmatprep.subr.mxu0 0.0
  %710 = vmatpush1.msra.mxu0 0.0
  %711 = vmatprep.subr.mxu0 0.0
  %712 = vmatpush1.msra.mxu0 0.0
  %713 = vmatprep.subr.mxu0 0.0
  %714 = vmatpush1.msra.mxu0 0.0
  %715 = vmatprep.subr.mxu0 0.0
  %716 = vmatpush1.msra.mxu0 0.0
  %717 = vmatprep.subr.mxu0 0.0
  %718 = vmatpush1.msra.mxu0 0.0
  %719 = vmatprep.subr.mxu0 0.0
  %720 = vmatpush1.msra.mxu0 0.0
  %721 = vmatprep.subr.mxu0 0.0
  %722 = vmatpush1.msra.mxu0 0.0
  %723 = vmatprep.subr.mxu0 0.0
  %724 = vmatpush1.msra.mxu0 0.0
  %725 = vmatprep.subr.mxu0 0.0
  %726 = vmatpush1.msra.mxu0 0.0
  %727 = vmatprep.subr.mxu0 0.0
  %728 = vmatpush1.msra.mxu0 0.0
  %729 = vmatprep.subr.mxu0 0.0
  %730 = vmatpush1.msra.mxu0 0.0
  %731 = vmatprep.subr.mxu0 0.0
  %732 = vmatpush1.msra.mxu0 0.0
  %733 = vmatprep.subr.mxu0 0.0
  %734 = vmatpush1.msra.mxu0 %v24
  %735 = vmatprep.subr.mxu0 0.0
  %736 = vmatpush1.msra.mxu0 %v23
  %737 = vmatprep.subr.mxu0 0.0
  %738 = vmatpush1.msra.mxu0 %v22
  %739 = vmatprep.subr.mxu0 0.0
  %740 = vmatpush1.msra.mxu0 %v21
  %741 = vmatprep.subr.mxu0 0.0
  %742 = vmatpush2.msra.mxu0 0.0
  %743 = vmatprep.subr.mxu0 0.0
  %744 = vmatpush2.msra.mxu0 0.0
  %745 = vmatprep.subr.mxu0 0.0
  %746 = vmatpush2.msra.mxu0 0.0
  %747 = vmatprep.subr.mxu0 0.0
  %748 = vmatpush2.msra.mxu0 0.0
  %749 = vmatprep.subr.mxu0 0.0
  %750 = vmatpush2.msra.mxu0 0.0
  %751 = vmatprep.subr.mxu0 0.0
  %752 = vmatpush2.msra.mxu0 0.0
  %753 = vmatprep.subr.mxu0 0.0
  %754 = vmatpush2.msra.mxu0 0.0
  %755 = vmatprep.subr.mxu0 0.0
  %756 = vmatpush2.msra.mxu0 0.0
  %757 = vmatprep.subr.mxu0 0.0
  %758 = vmatpush2.msra.mxu0 0.0
  %759 = vmatprep.subr.mxu0 0.0
  %760 = vmatpush2.msra.mxu0 0.0
  %761 = vmatprep.subr.mxu0 0.0
  %762 = vmatpush2.msra.mxu0 0.0
  %763 = vmatprep.subr.mxu0 0.0
  %764 = vmatpush2.msra.mxu0 0.0
  %765 = vmatprep.subr.mxu0 0.0
  %766 = vmatpush2.msra.mxu0 0.0
  %767 = vmatprep.subr.mxu0 0.0
  %768 = vmatpush2.msra.mxu0 0.0
  %769 = vmatprep.subr.mxu0 0.0
  %770 = vmatpush2.msra.mxu0 0.0
  %771 = vmatprep.subr.mxu0 0.0
  %772 = vmatpush2.msra.mxu0 0.0
  %773 = vmatprep.mubr.f32.mxu0 0.0
  %774 = vmatmul.mubr.f32.gmra.mxu0 %v707
  %v775 = vpop.f32.mrf.mxu0
  %v776 = vadd.f32 0.0, %v775
  %v777 = vpop.f32.mrf.mxu0
  %778 = vdwg.mxu0
  %v779 = vadd.f32 %v703, %v776
  %v780 = vxor.u32 %v779, 2147483648
  %v781 = vmul.f32 %v780, 1.442695
  %v782 = vpow.pop %v781
  %v783 = vadd.f32 %v782, 1.0
  %v784 = vrcp.pop %v783
  %v785 = vmul.f32 1.0, %v784
  %v786 = vtanh.pop %v779
  %v787 = vmul.f32 %v785, %v685
  %789 = vrot.lane.b32.xlu0 %v786, 64
  %v790 = vpop.permute.xlu0 %789
  %v792 = vmul.f32 %v785, %v790
  %794 = vrot.lane.b32.xlu0 %v792, 32
  %v795 = vpop.permute.xlu0 %794
  %v797 = vadd.f32 %v787, %v795
  %v798 = vtanh.pop %v797
  %800 = vrot.lane.b32.xlu0 %v798, 64
  %v801 = vpop.permute.xlu0 %800
  %v803 = vmul.f32 %v785, %v801
  %v804 = vpack.c.bf16 %v803, %v803
  %v806 = vunpack.c.l.b16 %v804
  %v807 = vpack.c.b16 %v806, %v806
  %808 = vrot.lane.b32.xlu0 %v807, 32
  %v809 = vpop.permute.xlu0 %808
  %s811 = scalar_lea.vmem %s2, 24
  %812 = vst.msk [vmem:[%s811] sm:$0xf] %vm139, %v809
  %s813 = scalar_lea.vmem %s0, 28
  %v814 = vld [vmem:[%s813] sm:$0xf]
  %v815 = vunpack.c.l.bf16 %v814
  %817 = vrot.lane.b32.xlu0 %v803, 32
  %v818 = vpop.permute.xlu0 %817
  %v819 = vsel %vm29, %v818, 0
  %821 = vmatprep.subr.mxu0 0.0
  %822 = vmatpush1.msra.mxu0 0.0
  %823 = vmatprep.subr.mxu0 0.0
  %824 = vmatpush1.msra.mxu0 0.0
  %825 = vmatprep.subr.mxu0 0.0
  %826 = vmatpush1.msra.mxu0 0.0
  %827 = vmatprep.subr.mxu0 0.0
  %828 = vmatpush1.msra.mxu0 0.0
  %829 = vmatprep.subr.mxu0 0.0
  %830 = vmatpush1.msra.mxu0 0.0
  %831 = vmatprep.subr.mxu0 0.0
  %832 = vmatpush1.msra.mxu0 0.0
  %833 = vmatprep.subr.mxu0 0.0
  %834 = vmatpush1.msra.mxu0 0.0
  %835 = vmatprep.subr.mxu0 0.0
  %836 = vmatpush1.msra.mxu0 0.0
  %837 = vmatprep.subr.mxu0 0.0
  %838 = vmatpush1.msra.mxu0 0.0
  %839 = vmatprep.subr.mxu0 0.0
  %840 = vmatpush1.msra.mxu0 0.0
  %841 = vmatprep.subr.mxu0 0.0
  %842 = vmatpush1.msra.mxu0 0.0
  %843 = vmatprep.subr.mxu0 0.0
  %844 = vmatpush1.msra.mxu0 0.0
  %845 = vmatprep.subr.mxu0 0.0
  %846 = vmatpush1.msra.mxu0 %v24
  %847 = vmatprep.subr.mxu0 0.0
  %848 = vmatpush1.msra.mxu0 %v23
  %849 = vmatprep.subr.mxu0 0.0
  %850 = vmatpush1.msra.mxu0 %v22
  %851 = vmatprep.subr.mxu0 0.0
  %852 = vmatpush1.msra.mxu0 %v21
  %853 = vmatprep.subr.mxu0 0.0
  %854 = vmatpush2.msra.mxu0 0.0
  %855 = vmatprep.subr.mxu0 0.0
  %856 = vmatpush2.msra.mxu0 0.0
  %857 = vmatprep.subr.mxu0 0.0
  %858 = vmatpush2.msra.mxu0 0.0
  %859 = vmatprep.subr.mxu0 0.0
  %860 = vmatpush2.msra.mxu0 0.0
  %861 = vmatprep.subr.mxu0 0.0
  %862 = vmatpush2.msra.mxu0 0.0
  %863 = vmatprep.subr.mxu0 0.0
  %864 = vmatpush2.msra.mxu0 0.0
  %865 = vmatprep.subr.mxu0 0.0
  %866 = vmatpush2.msra.mxu0 0.0
  %867 = vmatprep.subr.mxu0 0.0
  %868 = vmatpush2.msra.mxu0 0.0
  %869 = vmatprep.subr.mxu0 0.0
  %870 = vmatpush2.msra.mxu0 0.0
  %871 = vmatprep.subr.mxu0 0.0
  %872 = vmatpush2.msra.mxu0 0.0
  %873 = vmatprep.subr.mxu0 0.0
  %874 = vmatpush2.msra.mxu0 0.0
  %875 = vmatprep.subr.mxu0 0.0
  %876 = vmatpush2.msra.mxu0 0.0
  %877 = vmatprep.subr.mxu0 0.0
  %878 = vmatpush2.msra.mxu0 0.0
  %879 = vmatprep.subr.mxu0 0.0
  %880 = vmatpush2.msra.mxu0 0.0
  %881 = vmatprep.subr.mxu0 0.0
  %882 = vmatpush2.msra.mxu0 0.0
  %883 = vmatprep.subr.mxu0 0.0
  %884 = vmatpush2.msra.mxu0 0.0
  %885 = vmatprep.mubr.f32.mxu0 0.0
  %886 = vmatmul.mubr.f32.gmra.mxu0 %v819
  %v887 = vpop.f32.mrf.mxu0
  %v888 = vadd.f32 0.0, %v887
  %v889 = vpop.f32.mrf.mxu0
  %890 = vdwg.mxu0
  %v891 = vadd.f32 %v815, %v888
  %v892 = vxor.u32 %v891, 2147483648
  %v893 = vmul.f32 %v892, 1.442695
  %v894 = vpow.pop %v893
  %v895 = vadd.f32 %v894, 1.0
  %v896 = vrcp.pop %v895
  %v897 = vmul.f32 1.0, %v896
  %v898 = vtanh.pop %v891
  %v899 = vmul.f32 %v897, %v797
  %901 = vrot.lane.b32.xlu0 %v898, 64
  %v902 = vpop.permute.xlu0 %901
  %v904 = vmul.f32 %v897, %v902
  %906 = vrot.lane.b32.xlu0 %v904, 32
  %v907 = vpop.permute.xlu0 %906
  %v909 = vadd.f32 %v899, %v907
  %v910 = vtanh.pop %v909
  %912 = vrot.lane.b32.xlu0 %v910, 64
  %v913 = vpop.permute.xlu0 %912
  %v915 = vmul.f32 %v897, %v913
  %v916 = vpack.c.bf16 %v915, %v915
  %v918 = vunpack.c.l.b16 %v916
  %v919 = vpack.c.b16 %v918, %v918
  %920 = vrot.lane.b32.xlu0 %v919, 32
  %v921 = vpop.permute.xlu0 %920
  %s923 = scalar_lea.vmem %s2, 28
  %924 = vst.msk [vmem:[%s923] sm:$0xf] %vm139, %v921
  %926 = vrot.lane.b32.xlu0 %v915, 32
  %v927 = vpop.permute.xlu0 %926
  %929 = vst.msk [vmem:[%s3] sm:$0xff] %vm29, %v927
  %931 = vrot.lane.b32.xlu0 %v909, 96
  %v932 = vpop.permute.xlu0 %931
  %934 = vst.msk [vmem:[%s4] sm:$0xff] %vm29, %v932
  // Predicated region
  $region14: #{lstm_model_forward.6} parent=0 // pred_check
    _
  $region15: #{lstm_model_forward.6} parent=0 // pred_check_branch
    %936 = sbr.rel (0) target = $region17
  $region16: #{lstm_model_forward.6} parent=0 // pred_region
    _
  $region17: #{lstm_model_forward.6} parent=0 // pred_fallthru
    _
  // Predicated region
  $region18: #{lstm_model_forward.6} parent=0 // pred_check
    _
  $region19: #{lstm_model_forward.6} parent=0 // pred_check_branch
    %938 = sbr.rel (0) target = $region21
  $region20: #{lstm_model_forward.6} parent=0 // pred_region
    _
  $region21: #{lstm_model_forward.6} parent=0 // pred_fallthru
    _
  // Predicated region
  $region22: #{lstm_model_forward.6} parent=0 // pred_check
    _
  $region23: #{lstm_model_forward.6} parent=0 // pred_check_branch
    %940 = sbr.rel (0) target = $region25
  $region24: #{lstm_model_forward.6} parent=0 // pred_region
    _
  $region25: #{lstm_model_forward.6} parent=0 // pred_fallthru
    _
  // Predicated region
  $region26: #{lstm_model_forward.6} parent=0 // pred_check
    _
  $region27: #{lstm_model_forward.6} parent=0 // pred_check_branch
    %942 = sbr.rel (0) target = $region29
  $region28: #{lstm_model_forward.6} parent=0 // pred_region
    _
  $region29: #{lstm_model_forward.6} parent=0 // pred_fallthru
    _
  // Predicated region
  $region30: #{lstm_model_forward.6} parent=0 // pred_check
    _
  $region31: #{lstm_model_forward.6} parent=0 // pred_check_branch
    %944 = sbr.rel (0) target = $region33
  $region32: #{lstm_model_forward.6} parent=0 // pred_region
    _
  $region33: #{lstm_model_forward.6} parent=0 // pred_fallthru
    _
  // Predicated region
  $region34: #{lstm_model_forward.6} parent=0 // pred_check
    _
  $region35: #{lstm_model_forward.6} parent=0 // pred_check_branch
    %946 = sbr.rel (0) target = $region37
  $region36: #{lstm_model_forward.6} parent=0 // pred_region
    _
  $region37: #{lstm_model_forward.6} parent=0 // pred_fallthru
    _

</llo_original>
